<compile_context>
chip_gen: v5e
topology: v5e:2x2
jax: 0.10.0
libtpu: 0.0.40
codegen_flags: <defaults>
</compile_context>

<pallas_src>
import functools
import math

import jax
import jax.numpy as jnp
from jax.experimental import pallas as pl
from jax.experimental.pallas import tpu as pltpu


def _round_up(x, m):
    return (x + m - 1) // m * m


def _gelu_exact(x):
    # PyTorch activation='gelu' -> exact erf GELU.
    return 0.5 * x * (1.0 + jax.lax.erf(x * (1.0 / math.sqrt(2.0))))


def _layernorm(x, g, b, eps=1e-5):
    mu = jnp.mean(x, axis=-1, keepdims=True)
    xc = x - mu
    var = jnp.mean(xc * xc, axis=-1, keepdims=True)
    return xc * jax.lax.rsqrt(var + eps) * g + b


# ------------------------------ fused kernel ----------------------------------
def _fusion_kernel(num_mods, num_heads, *refs):
    # refs layout (inputs then output):
    #   x_0..x_{M-1}   [TILE_N, D_m]   bf16   raw modality rows
    #   w_0..w_{M-1}   [D_m, H]        bf16   projection weights
    #   b_0..b_{M-1}   [1, H]          f32    projection biases
    #   subj           [TILE_N, H]     f32    subject-token rows
    #   head_sum       [H, num_heads]  f32    per-head reduce matrix
    #   head_expand    [num_heads, H]  f32    per-head broadcast matrix
    #   wqkv[H,3H] bqkv[1,3H] wo[H,H] bo[1,H] ln1g ln1b
    #   wff1[H,4H] bff1[1,4H] wff2[4H,H] bff2[1,H] ln2g ln2b
    #   o              [TILE_N, S*H]   f32    fused 'concat' output
    M = num_mods
    it = iter(refs)
    x_refs = [next(it) for _ in range(M)]
    w_refs = [next(it) for _ in range(M)]
    b_refs = [next(it) for _ in range(M)]
    subj_ref = next(it)
    hsum_ref = next(it)
    hexp_ref = next(it)
    (wqkv_ref, bqkv_ref, wo_ref, bo_ref, ln1g_ref, ln1b_ref,
     wff1_ref, bff1_ref, wff2_ref, bff2_ref, ln2g_ref, ln2b_ref) = (
        next(it) for _ in range(12))
    o_ref = next(it)

    tile_n, H = subj_ref.shape
    S = M + 1
    dh = H // num_heads
    scale = 1.0 / math.sqrt(dh)

    # ---- modality projections (bf16 MXU operands, f32 accumulation) ----------
    toks = []
    for m in range(M):
        toks.append(
            jnp.dot(x_refs[m][...], w_refs[m][...],
                    preferred_element_type=jnp.float32) + b_refs[m][...])
    toks.append(subj_ref[...].astype(jnp.float32))

    # Tall activation: one matmul drives all S tokens through the MXU at once.
    xcat = jnp.concatenate(toks, axis=0)                    # [S*TILE_N, H] f32

    # ---- fused QKV projection -------------------------------------------------
    qkv = jnp.dot(xcat.astype(jnp.bfloat16), wqkv_ref[...],
                  preferred_element_type=jnp.float32) + bqkv_ref[...]
    q = qkv[:, 0:H] * scale                                 # scale hoisted once
    k = qkv[:, H:2 * H]
    v = qkv[:, 2 * H:3 * H]
    q3 = [q[s * tile_n:(s + 1) * tile_n, :] for s in range(S)]
    k3 = [k[s * tile_n:(s + 1) * tile_n, :] for s in range(S)]
    v3 = [v[s * tile_n:(s + 1) * tile_n, :] for s in range(S)]

    hsum = hsum_ref[...]
    hexp = hexp_ref[...]

    # ---- self attention over the S tokens of every row (lane-dense) ----------
    attn = []
    for s in range(S):
        # per-head scores for every key token t: [TILE_N, num_heads] (dense)
        sc = [jnp.dot(q3[s] * k3[t], hsum, preferred_element_type=jnp.float32)
              for t in range(S)]
        m_s = sc[0]
        for t in range(1, S):
            m_s = jnp.maximum(m_s, sc[t])
        es = [jnp.exp(sc[t] - m_s) for t in range(S)]
        denom = es[0]
        for t in range(1, S):
            denom = denom + es[t]
        inv = pl.reciprocal(denom, approx=True)             # EUP slot
        out_s = None
        for t in range(S):
            # broadcast per-head weight across that head's dh lanes via matmul
            p_wide = jnp.dot(es[t] * inv, hexp,
                             preferred_element_type=jnp.float32)  # [TILE_N, H]
            term = p_wide * v3[t]
            out_s = term if out_s is None else out_s + term
        attn.append(out_s)
    attn_cat = jnp.concatenate(attn, axis=0)                # [S*TILE_N, H]

    attn_proj = jnp.dot(attn_cat.astype(jnp.bfloat16), wo_ref[...],
                        preferred_element_type=jnp.float32) + bo_ref[...]

    # ---- post-norm residual blocks (PyTorch TransformerEncoderLayer default) -
    h1 = _layernorm(xcat + attn_proj, ln1g_ref[...], ln1b_ref[...])
    ff1 = jnp.dot(h1.astype(jnp.bfloat16), wff1_ref[...],
                  preferred_element_type=jnp.float32) + bff1_ref[...]
    ff = jnp.dot(_gelu_exact(ff1).astype(jnp.bfloat16), wff2_ref[...],
                 preferred_element_type=jnp.float32) + bff2_ref[...]
    y = _layernorm(h1 + ff, ln2g_ref[...], ln2b_ref[...])   # [S*TILE_N, H]

    # ---- emit fused 'concat' layout directly: o[n, s*H:(s+1)*H] = y_s[n, :] --
    for s in range(S):
        o_ref[:, s * H:(s + 1) * H] = (
            y[s * tile_n:(s + 1) * tile_n, :].astype(o_ref.dtype))


# ------------------------------- full forward ---------------------------------
def modality_fusion_forward(params, inputs, subject_ids, num_heads,
                            fuse_mode="concat", run_ids=None, tile_n=256):
    # run_ids unused: use_run_embeddings=False in this configuration.
    del run_ids
    names = list(params["proj"].keys())          # ModuleDict insertion order
    M = len(names)
    S = M + 1
    B, T, _ = inputs[names[0]].shape
    N = B * T
    H = params["subject_embeddings"].shape[1]
    dh = H // num_heads

    # Row tile: multiple of 8 sublanes, capped (lower tile_n on v7x / huge H).
    tn = min(_round_up(tile_n, 8), _round_up(N, 8))
    n_pad = _round_up(N, tn)
    grid = (n_pad // tn,)

    # Modality rows -> bf16 [n_pad, D_m]
    xs = []
    for name in names:
        x_m = inputs[name].reshape(N, -1).astype(jnp.bfloat16)
        xs.append(jnp.pad(x_m, ((0, n_pad - N), (0, 0))))

    # Subject-token rows (embedding gather is plain JAX glue outside the kernel)
    subj = params["subject_embeddings"][jnp.asarray(subject_ids, jnp.int32)]  # [B,H]
    subj_tok = jnp.broadcast_to(subj[:, None, :], (B, T, H)).reshape(N, H)
    subj_tok = jnp.pad(subj_tok.astype(jnp.float32), ((0, n_pad - N), (0, 0)))

    # Constant head reduce / expand matrices (block-diagonal one-hots).
    head_of = jnp.arange(H, dtype=jnp.int32) // dh
    head_sum = (head_of[:, None] ==
                jnp.arange(num_heads, dtype=jnp.int32)[None, :]).astype(jnp.float32)
    head_expand = head_sum.T

    # Weights feeding the MXU in bf16; biases / LN params stay f32.
    w_mods = [params["proj"][n][0].astype(jnp.bfloat16) for n in names]
    b_mods = [params["proj"][n][1].astype(jnp.float32) for n in names]
    (wqkv, bqkv, wo, bo, ln1g, ln1b,
     wff1, bff1, wff2, bff2, ln2g, ln2b) = params["tfm"]
    tfm_ops = (wqkv.astype(jnp.bfloat16), bqkv.astype(jnp.float32),
               wo.astype(jnp.bfloat16), bo.astype(jnp.float32),
               ln1g, ln1b,
               wff1.astype(jnp.bfloat16), bff1.astype(jnp.float32),
               wff2.astype(jnp.bfloat16), bff2.astype(jnp.float32),
               ln2g, ln2b)

    def row_spec(d):
        return pl.BlockSpec((tn, d), lambda i: (i, 0))

    def full_spec(shape):
        nd = len(shape)
        return pl.BlockSpec(shape, lambda i, _nd=nd: (0,) * _nd)

    in_specs = ([row_spec(x.shape[1]) for x in xs]
                + [full_spec(w.shape) for w in w_mods]
                + [full_spec(b.shape) for b in b_mods]
                + [row_spec(H), full_spec(head_sum.shape),
                   full_spec(head_expand.shape)]
                + [full_spec(p.shape) for p in tfm_ops])
    out_specs = pl.BlockSpec((tn, S * H), lambda i: (i, 0))

    flops = int(2 * n_pad * (sum(x.shape[1] for x in xs) * H + 12 * S * H * H))
    transcendentals = int(n_pad * (S * S * num_heads + S * 4 * H))
    bytes_accessed = int(
        sum(a.size * a.dtype.itemsize
            for a in (*xs, *w_mods, *b_mods, subj_tok, head_sum, head_expand,
                      *tfm_ops))
        + n_pad * S * H * 4)

    kernel = functools.partial(_fusion_kernel, M, num_heads)
    fused = pl.pallas_call(
        kernel,
        out_shape=jax.ShapeDtypeStruct((n_pad, S * H), jnp.float32),
        grid=grid,
        in_specs=in_specs,
        out_specs=out_specs,
        compiler_params=pltpu.CompilerParams(
            dimension_semantics=("parallel",),
            vmem_limit_bytes=48 * 1024 * 1024),
        cost_estimate=pl.CostEstimate(flops=flops,
                                      transcendentals=transcendentals,
                                      bytes_accessed=bytes_accessed),
    )(*xs, *w_mods, *b_mods, subj_tok, head_sum, head_expand, *tfm_ops)

    fused = fused[:N]
    if fuse_mode == "mean":
        fused = fused.reshape(N, S, H).mean(axis=1)
    return fused.reshape(B, T, -1)


# ------------------------------ param creation --------------------------------
def init_params(key, input_dims, subject_count, hidden_dim):
    def nrm(k, shape, scale=0.05):
        return scale * jax.random.normal(k, shape, jnp.float32)

    keys = jax.random.split(key, 16)
    H = hidden_dim

    proj = {}
    for i, (name, dim) in enumerate(input_dims.items()):
        kw, kb = jax.random.split(keys[i], 2)
        proj[name] = (nrm(kw, (dim, H)), nrm(kb, (1, H)))

    subject_embeddings = nrm(keys[4], (subject_count + 1, H))

    tfm = (
        nrm(keys[5], (H, 3 * H)),            # in_proj weight (Wq|Wk|Wv)
        nrm(keys[6], (1, 3 * H)),            # in_proj bias
        nrm(keys[7], (H, H)),                # out_proj weight
        nrm(keys[8], (1, H)),                # out_proj bias
        jnp.ones((1, H), jnp.float32),       # norm1 gamma
        jnp.zeros((1, H), jnp.float32),      # norm1 beta
        nrm(keys[9], (H, 4 * H)),            # ffn linear1 weight
        nrm(keys[10], (1, 4 * H)),           # ffn linear1 bias
        nrm(keys[11], (4 * H, H)),           # ffn linear2 weight
        nrm(keys[12], (1, H)),               # ffn linear2 bias
        jnp.ones((1, H), jnp.float32),       # norm2 gamma
        jnp.zeros((1, H), jnp.float32),      # norm2 beta
    )
    return {"proj": proj, "subject_embeddings": subject_embeddings, "tfm": tfm}


if __name__ == "__main__":
    key = jax.random.PRNGKey(0)
    input_dims = {"eeg": 16, "audio": 24}
    B, T, H = 2, 8, 32
    num_heads = 4
    subject_count = 4

    k_p, k_eeg, k_aud = jax.random.split(key, 3)
    params = init_params(k_p, input_dims, subject_count, H)

    inputs = {
        "eeg": jax.random.normal(k_eeg, (B, T, input_dims["eeg"]), jnp.float32),
        "audio": jax.random.normal(k_aud, (B, T, input_dims["audio"]), jnp.float32),
    }
    subject_ids = [0, 3]
    run_ids = [0, 1]  # unused: use_run_embeddings=False

    out = modality_fusion_forward(params, inputs, subject_ids, num_heads,
                                  fuse_mode="concat", run_ids=run_ids)
    out = jax.block_until_ready(out)

    S = len(input_dims) + 1  # modalities + subject token
    assert out.shape == (B, T, S * H), out.shape
    assert bool(jnp.all(jnp.isfinite(out)))
    print("KERNEL_OK")
</pallas_src>

<mosaic_0001>
module attributes {stable_mosaic.version = 11 : i64} {
  func.func @_fusion_kernel(%arg0: i32, %arg1: memref<16x16xbf16, #tpu.memory_space<vmem>>, %arg2: memref<16x24xbf16, #tpu.memory_space<vmem>>, %arg3: memref<16x32xbf16, #tpu.memory_space<vmem>>, %arg4: memref<24x32xbf16, #tpu.memory_space<vmem>>, %arg5: memref<1x32xf32, #tpu.memory_space<vmem>>, %arg6: memref<1x32xf32, #tpu.memory_space<vmem>>, %arg7: memref<16x32xf32, #tpu.memory_space<vmem>>, %arg8: memref<32x4xf32, #tpu.memory_space<vmem>>, %arg9: memref<4x32xf32, #tpu.memory_space<vmem>>, %arg10: memref<32x96xbf16, #tpu.memory_space<vmem>>, %arg11: memref<1x96xf32, #tpu.memory_space<vmem>>, %arg12: memref<32x32xbf16, #tpu.memory_space<vmem>>, %arg13: memref<1x32xf32, #tpu.memory_space<vmem>>, %arg14: memref<1x32xf32, #tpu.memory_space<vmem>>, %arg15: memref<1x32xf32, #tpu.memory_space<vmem>>, %arg16: memref<32x128xbf16, #tpu.memory_space<vmem>>, %arg17: memref<1x128xf32, #tpu.memory_space<vmem>>, %arg18: memref<128x32xbf16, #tpu.memory_space<vmem>>, %arg19: memref<1x32xf32, #tpu.memory_space<vmem>>, %arg20: memref<1x32xf32, #tpu.memory_space<vmem>>, %arg21: memref<1x32xf32, #tpu.memory_space<vmem>>, %arg22: memref<16x96xf32, #tpu.memory_space<vmem>>) attributes {dimension_semantics = [#tpu.dimension_semantics<parallel>], iteration_bounds = array<i64: 1>, scalar_prefetch = 0 : i64, scratch_operands = 0 : i64, tpu.core_type = #tpu.core_type<tc>, window_params = [{transform_indices = @transform_0, window_bounds = array<i64: 16, 16>}, {transform_indices = @transform_1, window_bounds = array<i64: 16, 24>}, {pipeline_mode = #tpu.pipeline_mode<synchronous>, transform_indices = @transform_2, window_bounds = array<i64: 16, 32>}, {pipeline_mode = #tpu.pipeline_mode<synchronous>, transform_indices = @transform_3, window_bounds = array<i64: 24, 32>}, {pipeline_mode = #tpu.pipeline_mode<synchronous>, transform_indices = @transform_4, window_bounds = array<i64: 1, 32>}, {pipeline_mode = #tpu.pipeline_mode<synchronous>, transform_indices = @transform_5, window_bounds = array<i64: 1, 32>}, {transform_indices = @transform_6, window_bounds = array<i64: 16, 32>}, {pipeline_mode = #tpu.pipeline_mode<synchronous>, transform_indices = @transform_7, window_bounds = array<i64: 32, 4>}, {pipeline_mode = #tpu.pipeline_mode<synchronous>, transform_indices = @transform_8, window_bounds = array<i64: 4, 32>}, {pipeline_mode = #tpu.pipeline_mode<synchronous>, transform_indices = @transform_9, window_bounds = array<i64: 32, 96>}, {pipeline_mode = #tpu.pipeline_mode<synchronous>, transform_indices = @transform_10, window_bounds = array<i64: 1, 96>}, {pipeline_mode = #tpu.pipeline_mode<synchronous>, transform_indices = @transform_11, window_bounds = array<i64: 32, 32>}, {pipeline_mode = #tpu.pipeline_mode<synchronous>, transform_indices = @transform_12, window_bounds = array<i64: 1, 32>}, {pipeline_mode = #tpu.pipeline_mode<synchronous>, transform_indices = @transform_13, window_bounds = array<i64: 1, 32>}, {pipeline_mode = #tpu.pipeline_mode<synchronous>, transform_indices = @transform_14, window_bounds = array<i64: 1, 32>}, {pipeline_mode = #tpu.pipeline_mode<synchronous>, transform_indices = @transform_15, window_bounds = array<i64: 32, 128>}, {pipeline_mode = #tpu.pipeline_mode<synchronous>, transform_indices = @transform_16, window_bounds = array<i64: 1, 128>}, {pipeline_mode = #tpu.pipeline_mode<synchronous>, transform_indices = @transform_17, window_bounds = array<i64: 128, 32>}, {pipeline_mode = #tpu.pipeline_mode<synchronous>, transform_indices = @transform_18, window_bounds = array<i64: 1, 32>}, {pipeline_mode = #tpu.pipeline_mode<synchronous>, transform_indices = @transform_19, window_bounds = array<i64: 1, 32>}, {pipeline_mode = #tpu.pipeline_mode<synchronous>, transform_indices = @transform_20, window_bounds = array<i64: 1, 32>}, {transform_indices = @transform_21, window_bounds = array<i64: 16, 96>}]} {
    %c0 = arith.constant 0 : index
    %c0_0 = arith.constant 0 : index
    %0 = vector.load %arg1[%c0, %c0_0] : memref<16x16xbf16, #tpu.memory_space<vmem>>, vector<16x16xbf16>
    %c0_1 = arith.constant 0 : index
    %c0_2 = arith.constant 0 : index
    %1 = vector.load %arg3[%c0_1, %c0_2] : memref<16x32xbf16, #tpu.memory_space<vmem>>, vector<16x32xbf16>
    %cst = arith.constant dense<0.000000e+00> : vector<16x32xf32>
    %2 = tpu.matmul %0, %1, %cst {dimension_numbers = #tpu.dot_dimension_numbers<[1], [0], [0], [1], [0, 0, 1, 1], [], []>} : vector<16x16xbf16>, vector<16x32xbf16>, vector<16x32xf32> -> vector<16x32xf32>
    %c0_3 = arith.constant 0 : index
    %c0_4 = arith.constant 0 : index
    %3 = vector.load %arg5[%c0_3, %c0_4] : memref<1x32xf32, #tpu.memory_space<vmem>>, vector<1x32xf32>
    %4 = vector.broadcast %3 : vector<1x32xf32> to vector<16x32xf32>
    %5 = arith.addf %2, %4 : vector<16x32xf32>
    %c0_5 = arith.constant 0 : index
    %c0_6 = arith.constant 0 : index
    %6 = vector.load %arg2[%c0_5, %c0_6] : memref<16x24xbf16, #tpu.memory_space<vmem>>, vector<16x24xbf16>
    %c0_7 = arith.constant 0 : index
    %c0_8 = arith.constant 0 : index
    %7 = vector.load %arg4[%c0_7, %c0_8] : memref<24x32xbf16, #tpu.memory_space<vmem>>, vector<24x32xbf16>
    %cst_9 = arith.constant dense<0.000000e+00> : vector<16x32xf32>
    %8 = tpu.matmul %6, %7, %cst_9 {dimension_numbers = #tpu.dot_dimension_numbers<[1], [0], [0], [1], [0, 0, 1, 1], [], []>} : vector<16x24xbf16>, vector<24x32xbf16>, vector<16x32xf32> -> vector<16x32xf32>
    %c0_10 = arith.constant 0 : index
    %c0_11 = arith.constant 0 : index
    %9 = vector.load %arg6[%c0_10, %c0_11] : memref<1x32xf32, #tpu.memory_space<vmem>>, vector<1x32xf32>
    %10 = vector.broadcast %9 : vector<1x32xf32> to vector<16x32xf32>
    %11 = arith.addf %8, %10 : vector<16x32xf32>
    %c0_12 = arith.constant 0 : index
    %c0_13 = arith.constant 0 : index
    %12 = vector.load %arg7[%c0_12, %c0_13] : memref<16x32xf32, #tpu.memory_space<vmem>>, vector<16x32xf32>
    %13 = tpu.concatenate %5, %11, %12 in 0 : vector<16x32xf32>, vector<16x32xf32>, vector<16x32xf32> -> vector<48x32xf32>
    %14 = arith.truncf %13 : vector<48x32xf32> to vector<48x32xbf16>
    %c0_14 = arith.constant 0 : index
    %c0_15 = arith.constant 0 : index
    %15 = vector.load %arg10[%c0_14, %c0_15] : memref<32x96xbf16, #tpu.memory_space<vmem>>, vector<32x96xbf16>
    %cst_16 = arith.constant dense<0.000000e+00> : vector<48x96xf32>
    %16 = tpu.matmul %14, %15, %cst_16 {dimension_numbers = #tpu.dot_dimension_numbers<[1], [0], [0], [1], [0, 0, 1, 1], [], []>} : vector<48x32xbf16>, vector<32x96xbf16>, vector<48x96xf32> -> vector<48x96xf32>
    %c0_17 = arith.constant 0 : index
    %c0_18 = arith.constant 0 : index
    %17 = vector.load %arg11[%c0_17, %c0_18] : memref<1x96xf32, #tpu.memory_space<vmem>>, vector<1x96xf32>
    %18 = vector.broadcast %17 : vector<1x96xf32> to vector<48x96xf32>
    %19 = arith.addf %16, %18 : vector<48x96xf32>
    %20 = vector.extract_strided_slice %19 {offsets = [0, 0], sizes = [48, 32], strides = [1, 1]} : vector<48x96xf32> to vector<48x32xf32>
    %cst_19 = arith.constant 0.353553385 : f32
    %21 = vector.broadcast %cst_19 : f32 to vector<48x32xf32>
    %22 = arith.mulf %20, %21 : vector<48x32xf32>
    %23 = vector.extract_strided_slice %19 {offsets = [0, 32], sizes = [48, 32], strides = [1, 1]} : vector<48x96xf32> to vector<48x32xf32>
    %24 = vector.extract_strided_slice %19 {offsets = [0, 64], sizes = [48, 32], strides = [1, 1]} : vector<48x96xf32> to vector<48x32xf32>
    %25 = vector.extract_strided_slice %22 {offsets = [0, 0], sizes = [16, 32], strides = [1, 1]} : vector<48x32xf32> to vector<16x32xf32>
    %26 = vector.extract_strided_slice %22 {offsets = [16, 0], sizes = [16, 32], strides = [1, 1]} : vector<48x32xf32> to vector<16x32xf32>
    %27 = vector.extract_strided_slice %22 {offsets = [32, 0], sizes = [16, 32], strides = [1, 1]} : vector<48x32xf32> to vector<16x32xf32>
    %28 = vector.extract_strided_slice %23 {offsets = [0, 0], sizes = [16, 32], strides = [1, 1]} : vector<48x32xf32> to vector<16x32xf32>
    %29 = vector.extract_strided_slice %23 {offsets = [16, 0], sizes = [16, 32], strides = [1, 1]} : vector<48x32xf32> to vector<16x32xf32>
    %30 = vector.extract_strided_slice %23 {offsets = [32, 0], sizes = [16, 32], strides = [1, 1]} : vector<48x32xf32> to vector<16x32xf32>
    %31 = vector.extract_strided_slice %24 {offsets = [0, 0], sizes = [16, 32], strides = [1, 1]} : vector<48x32xf32> to vector<16x32xf32>
    %32 = vector.extract_strided_slice %24 {offsets = [16, 0], sizes = [16, 32], strides = [1, 1]} : vector<48x32xf32> to vector<16x32xf32>
    %33 = vector.extract_strided_slice %24 {offsets = [32, 0], sizes = [16, 32], strides = [1, 1]} : vector<48x32xf32> to vector<16x32xf32>
    %c0_20 = arith.constant 0 : index
    %c0_21 = arith.constant 0 : index
    %34 = vector.load %arg8[%c0_20, %c0_21] : memref<32x4xf32, #tpu.memory_space<vmem>>, vector<32x4xf32>
    %c0_22 = arith.constant 0 : index
    %c0_23 = arith.constant 0 : index
    %35 = vector.load %arg9[%c0_22, %c0_23] : memref<4x32xf32, #tpu.memory_space<vmem>>, vector<4x32xf32>
    %36 = arith.mulf %25, %28 : vector<16x32xf32>
    %cst_24 = arith.constant dense<0.000000e+00> : vector<16x4xf32>
    %37 = tpu.matmul %36, %34, %cst_24 {dimension_numbers = #tpu.dot_dimension_numbers<[1], [0], [0], [1], [0, 0, 1, 1], [], []>} : vector<16x32xf32>, vector<32x4xf32>, vector<16x4xf32> -> vector<16x4xf32>
    %38 = arith.mulf %25, %29 : vector<16x32xf32>
    %cst_25 = arith.constant dense<0.000000e+00> : vector<16x4xf32>
    %39 = tpu.matmul %38, %34, %cst_25 {dimension_numbers = #tpu.dot_dimension_numbers<[1], [0], [0], [1], [0, 0, 1, 1], [], []>} : vector<16x32xf32>, vector<32x4xf32>, vector<16x4xf32> -> vector<16x4xf32>
    %40 = arith.mulf %25, %30 : vector<16x32xf32>
    %cst_26 = arith.constant dense<0.000000e+00> : vector<16x4xf32>
    %41 = tpu.matmul %40, %34, %cst_26 {dimension_numbers = #tpu.dot_dimension_numbers<[1], [0], [0], [1], [0, 0, 1, 1], [], []>} : vector<16x32xf32>, vector<32x4xf32>, vector<16x4xf32> -> vector<16x4xf32>
    %42 = arith.maximumf %37, %39 : vector<16x4xf32>
    %43 = arith.maximumf %42, %41 : vector<16x4xf32>
    %44 = arith.subf %37, %43 : vector<16x4xf32>
    %45 = math.exp %44 : vector<16x4xf32>
    %46 = arith.subf %39, %43 : vector<16x4xf32>
    %47 = math.exp %46 : vector<16x4xf32>
    %48 = arith.subf %41, %43 : vector<16x4xf32>
    %49 = math.exp %48 : vector<16x4xf32>
    %50 = arith.addf %45, %47 : vector<16x4xf32>
    %51 = arith.addf %50, %49 : vector<16x4xf32>
    %52 = tpu.reciprocal %51 {approx = true} : vector<16x4xf32> -> vector<16x4xf32>
    %53 = arith.mulf %45, %52 : vector<16x4xf32>
    %cst_27 = arith.constant dense<0.000000e+00> : vector<16x32xf32>
    %54 = tpu.matmul %53, %35, %cst_27 {dimension_numbers = #tpu.dot_dimension_numbers<[1], [0], [0], [1], [0, 0, 1, 1], [], []>} : vector<16x4xf32>, vector<4x32xf32>, vector<16x32xf32> -> vector<16x32xf32>
    %55 = arith.mulf %54, %31 : vector<16x32xf32>
    %56 = arith.mulf %47, %52 : vector<16x4xf32>
    %cst_28 = arith.constant dense<0.000000e+00> : vector<16x32xf32>
    %57 = tpu.matmul %56, %35, %cst_28 {dimension_numbers = #tpu.dot_dimension_numbers<[1], [0], [0], [1], [0, 0, 1, 1], [], []>} : vector<16x4xf32>, vector<4x32xf32>, vector<16x32xf32> -> vector<16x32xf32>
    %58 = arith.mulf %57, %32 : vector<16x32xf32>
    %59 = arith.addf %55, %58 : vector<16x32xf32>
    %60 = arith.mulf %49, %52 : vector<16x4xf32>
    %cst_29 = arith.constant dense<0.000000e+00> : vector<16x32xf32>
    %61 = tpu.matmul %60, %35, %cst_29 {dimension_numbers = #tpu.dot_dimension_numbers<[1], [0], [0], [1], [0, 0, 1, 1], [], []>} : vector<16x4xf32>, vector<4x32xf32>, vector<16x32xf32> -> vector<16x32xf32>
    %62 = arith.mulf %61, %33 : vector<16x32xf32>
    %63 = arith.addf %59, %62 : vector<16x32xf32>
    %64 = arith.mulf %26, %28 : vector<16x32xf32>
    %cst_30 = arith.constant dense<0.000000e+00> : vector<16x4xf32>
    %65 = tpu.matmul %64, %34, %cst_30 {dimension_numbers = #tpu.dot_dimension_numbers<[1], [0], [0], [1], [0, 0, 1, 1], [], []>} : vector<16x32xf32>, vector<32x4xf32>, vector<16x4xf32> -> vector<16x4xf32>
    %66 = arith.mulf %26, %29 : vector<16x32xf32>
    %cst_31 = arith.constant dense<0.000000e+00> : vector<16x4xf32>
    %67 = tpu.matmul %66, %34, %cst_31 {dimension_numbers = #tpu.dot_dimension_numbers<[1], [0], [0], [1], [0, 0, 1, 1], [], []>} : vector<16x32xf32>, vector<32x4xf32>, vector<16x4xf32> -> vector<16x4xf32>
    %68 = arith.mulf %26, %30 : vector<16x32xf32>
    %cst_32 = arith.constant dense<0.000000e+00> : vector<16x4xf32>
    %69 = tpu.matmul %68, %34, %cst_32 {dimension_numbers = #tpu.dot_dimension_numbers<[1], [0], [0], [1], [0, 0, 1, 1], [], []>} : vector<16x32xf32>, vector<32x4xf32>, vector<16x4xf32> -> vector<16x4xf32>
    %70 = arith.maximumf %65, %67 : vector<16x4xf32>
    %71 = arith.maximumf %70, %69 : vector<16x4xf32>
    %72 = arith.subf %65, %71 : vector<16x4xf32>
    %73 = math.exp %72 : vector<16x4xf32>
    %74 = arith.subf %67, %71 : vector<16x4xf32>
    %75 = math.exp %74 : vector<16x4xf32>
    %76 = arith.subf %69, %71 : vector<16x4xf32>
    %77 = math.exp %76 : vector<16x4xf32>
    %78 = arith.addf %73, %75 : vector<16x4xf32>
    %79 = arith.addf %78, %77 : vector<16x4xf32>
    %80 = tpu.reciprocal %79 {approx = true} : vector<16x4xf32> -> vector<16x4xf32>
    %81 = arith.mulf %73, %80 : vector<16x4xf32>
    %cst_33 = arith.constant dense<0.000000e+00> : vector<16x32xf32>
    %82 = tpu.matmul %81, %35, %cst_33 {dimension_numbers = #tpu.dot_dimension_numbers<[1], [0], [0], [1], [0, 0, 1, 1], [], []>} : vector<16x4xf32>, vector<4x32xf32>, vector<16x32xf32> -> vector<16x32xf32>
    %83 = arith.mulf %82, %31 : vector<16x32xf32>
    %84 = arith.mulf %75, %80 : vector<16x4xf32>
    %cst_34 = arith.constant dense<0.000000e+00> : vector<16x32xf32>
    %85 = tpu.matmul %84, %35, %cst_34 {dimension_numbers = #tpu.dot_dimension_numbers<[1], [0], [0], [1], [0, 0, 1, 1], [], []>} : vector<16x4xf32>, vector<4x32xf32>, vector<16x32xf32> -> vector<16x32xf32>
    %86 = arith.mulf %85, %32 : vector<16x32xf32>
    %87 = arith.addf %83, %86 : vector<16x32xf32>
    %88 = arith.mulf %77, %80 : vector<16x4xf32>
    %cst_35 = arith.constant dense<0.000000e+00> : vector<16x32xf32>
    %89 = tpu.matmul %88, %35, %cst_35 {dimension_numbers = #tpu.dot_dimension_numbers<[1], [0], [0], [1], [0, 0, 1, 1], [], []>} : vector<16x4xf32>, vector<4x32xf32>, vector<16x32xf32> -> vector<16x32xf32>
    %90 = arith.mulf %89, %33 : vector<16x32xf32>
    %91 = arith.addf %87, %90 : vector<16x32xf32>
    %92 = arith.mulf %27, %28 : vector<16x32xf32>
    %cst_36 = arith.constant dense<0.000000e+00> : vector<16x4xf32>
    %93 = tpu.matmul %92, %34, %cst_36 {dimension_numbers = #tpu.dot_dimension_numbers<[1], [0], [0], [1], [0, 0, 1, 1], [], []>} : vector<16x32xf32>, vector<32x4xf32>, vector<16x4xf32> -> vector<16x4xf32>
    %94 = arith.mulf %27, %29 : vector<16x32xf32>
    %cst_37 = arith.constant dense<0.000000e+00> : vector<16x4xf32>
    %95 = tpu.matmul %94, %34, %cst_37 {dimension_numbers = #tpu.dot_dimension_numbers<[1], [0], [0], [1], [0, 0, 1, 1], [], []>} : vector<16x32xf32>, vector<32x4xf32>, vector<16x4xf32> -> vector<16x4xf32>
    %96 = arith.mulf %27, %30 : vector<16x32xf32>
    %cst_38 = arith.constant dense<0.000000e+00> : vector<16x4xf32>
    %97 = tpu.matmul %96, %34, %cst_38 {dimension_numbers = #tpu.dot_dimension_numbers<[1], [0], [0], [1], [0, 0, 1, 1], [], []>} : vector<16x32xf32>, vector<32x4xf32>, vector<16x4xf32> -> vector<16x4xf32>
    %98 = arith.maximumf %93, %95 : vector<16x4xf32>
    %99 = arith.maximumf %98, %97 : vector<16x4xf32>
    %100 = arith.subf %93, %99 : vector<16x4xf32>
    %101 = math.exp %100 : vector<16x4xf32>
    %102 = arith.subf %95, %99 : vector<16x4xf32>
    %103 = math.exp %102 : vector<16x4xf32>
    %104 = arith.subf %97, %99 : vector<16x4xf32>
    %105 = math.exp %104 : vector<16x4xf32>
    %106 = arith.addf %101, %103 : vector<16x4xf32>
    %107 = arith.addf %106, %105 : vector<16x4xf32>
    %108 = tpu.reciprocal %107 {approx = true} : vector<16x4xf32> -> vector<16x4xf32>
    %109 = arith.mulf %101, %108 : vector<16x4xf32>
    %cst_39 = arith.constant dense<0.000000e+00> : vector<16x32xf32>
    %110 = tpu.matmul %109, %35, %cst_39 {dimension_numbers = #tpu.dot_dimension_numbers<[1], [0], [0], [1], [0, 0, 1, 1], [], []>} : vector<16x4xf32>, vector<4x32xf32>, vector<16x32xf32> -> vector<16x32xf32>
    %111 = arith.mulf %110, %31 : vector<16x32xf32>
    %112 = arith.mulf %103, %108 : vector<16x4xf32>
    %cst_40 = arith.constant dense<0.000000e+00> : vector<16x32xf32>
    %113 = tpu.matmul %112, %35, %cst_40 {dimension_numbers = #tpu.dot_dimension_numbers<[1], [0], [0], [1], [0, 0, 1, 1], [], []>} : vector<16x4xf32>, vector<4x32xf32>, vector<16x32xf32> -> vector<16x32xf32>
    %114 = arith.mulf %113, %32 : vector<16x32xf32>
    %115 = arith.addf %111, %114 : vector<16x32xf32>
    %116 = arith.mulf %105, %108 : vector<16x4xf32>
    %cst_41 = arith.constant dense<0.000000e+00> : vector<16x32xf32>
    %117 = tpu.matmul %116, %35, %cst_41 {dimension_numbers = #tpu.dot_dimension_numbers<[1], [0], [0], [1], [0, 0, 1, 1], [], []>} : vector<16x4xf32>, vector<4x32xf32>, vector<16x32xf32> -> vector<16x32xf32>
    %118 = arith.mulf %117, %33 : vector<16x32xf32>
    %119 = arith.addf %115, %118 : vector<16x32xf32>
    %120 = tpu.concatenate %63, %91, %119 in 0 : vector<16x32xf32>, vector<16x32xf32>, vector<16x32xf32> -> vector<48x32xf32>
    %121 = arith.truncf %120 : vector<48x32xf32> to vector<48x32xbf16>
    %c0_42 = arith.constant 0 : index
    %c0_43 = arith.constant 0 : index
    %122 = vector.load %arg12[%c0_42, %c0_43] : memref<32x32xbf16, #tpu.memory_space<vmem>>, vector<32x32xbf16>
    %cst_44 = arith.constant dense<0.000000e+00> : vector<48x32xf32>
    %123 = tpu.matmul %121, %122, %cst_44 {dimension_numbers = #tpu.dot_dimension_numbers<[1], [0], [0], [1], [0, 0, 1, 1], [], []>} : vector<48x32xbf16>, vector<32x32xbf16>, vector<48x32xf32> -> vector<48x32xf32>
    %c0_45 = arith.constant 0 : index
    %c0_46 = arith.constant 0 : index
    %124 = vector.load %arg13[%c0_45, %c0_46] : memref<1x32xf32, #tpu.memory_space<vmem>>, vector<1x32xf32>
    %125 = vector.broadcast %124 : vector<1x32xf32> to vector<48x32xf32>
    %126 = arith.addf %123, %125 : vector<48x32xf32>
    %127 = arith.addf %13, %126 : vector<48x32xf32>
    %c0_47 = arith.constant 0 : index
    %c0_48 = arith.constant 0 : index
    %128 = vector.load %arg14[%c0_47, %c0_48] : memref<1x32xf32, #tpu.memory_space<vmem>>, vector<1x32xf32>
    %c0_49 = arith.constant 0 : index
    %c0_50 = arith.constant 0 : index
    %129 = vector.load %arg15[%c0_49, %c0_50] : memref<1x32xf32, #tpu.memory_space<vmem>>, vector<1x32xf32>
    %cst_51 = arith.constant dense<0.000000e+00> : vector<48xf32>
    %130 = vector.multi_reduction <add>, %127, %cst_51 [1] : vector<48x32xf32> to vector<48xf32>
    %131 = vector.shape_cast %130 : vector<48xf32> to vector<48x1xf32>
    %cst_52 = arith.constant 3.200000e+01 : f32
    %132 = vector.broadcast %cst_52 : f32 to vector<48x1xf32>
    %133 = arith.divf %131, %132 : vector<48x1xf32>
    %134 = vector.broadcast %133 : vector<48x1xf32> to vector<48x32xf32>
    %135 = arith.subf %127, %134 : vector<48x32xf32>
    %136 = arith.mulf %135, %135 : vector<48x32xf32>
    %cst_53 = arith.constant dense<0.000000e+00> : vector<48xf32>
    %137 = vector.multi_reduction <add>, %136, %cst_53 [1] : vector<48x32xf32> to vector<48xf32>
    %138 = vector.shape_cast %137 : vector<48xf32> to vector<48x1xf32>
    %cst_54 = arith.constant 3.200000e+01 : f32
    %139 = vector.broadcast %cst_54 : f32 to vector<48x1xf32>
    %140 = arith.divf %138, %139 : vector<48x1xf32>
    %cst_55 = arith.constant 9.99999974E-6 : f32
    %141 = vector.broadcast %cst_55 : f32 to vector<48x1xf32>
    %142 = arith.addf %140, %141 : vector<48x1xf32>
    %143 = math.rsqrt %142 : vector<48x1xf32>
    %144 = vector.broadcast %143 : vector<48x1xf32> to vector<48x32xf32>
    %145 = arith.mulf %135, %144 : vector<48x32xf32>
    %146 = vector.broadcast %128 : vector<1x32xf32> to vector<48x32xf32>
    %147 = arith.mulf %145, %146 : vector<48x32xf32>
    %148 = vector.broadcast %129 : vector<1x32xf32> to vector<48x32xf32>
    %149 = arith.addf %147, %148 : vector<48x32xf32>
    %150 = arith.truncf %149 : vector<48x32xf32> to vector<48x32xbf16>
    %c0_56 = arith.constant 0 : index
    %c0_57 = arith.constant 0 : index
    %151 = vector.load %arg16[%c0_56, %c0_57] : memref<32x128xbf16, #tpu.memory_space<vmem>>, vector<32x128xbf16>
    %cst_58 = arith.constant dense<0.000000e+00> : vector<48x128xf32>
    %152 = tpu.matmul %150, %151, %cst_58 {dimension_numbers = #tpu.dot_dimension_numbers<[1], [0], [0], [1], [0, 0, 1, 1], [], []>} : vector<48x32xbf16>, vector<32x128xbf16>, vector<48x128xf32> -> vector<48x128xf32>
    %c0_59 = arith.constant 0 : index
    %c0_60 = arith.constant 0 : index
    %153 = vector.load %arg17[%c0_59, %c0_60] : memref<1x128xf32, #tpu.memory_space<vmem>>, vector<1x128xf32>
    %154 = vector.broadcast %153 : vector<1x128xf32> to vector<48x128xf32>
    %155 = arith.addf %152, %154 : vector<48x128xf32>
    %cst_61 = arith.constant 5.000000e-01 : f32
    %156 = vector.broadcast %cst_61 : f32 to vector<48x128xf32>
    %157 = arith.mulf %156, %155 : vector<48x128xf32>
    %cst_62 = arith.constant 0.707106769 : f32
    %158 = vector.broadcast %cst_62 : f32 to vector<48x128xf32>
    %159 = arith.mulf %155, %158 : vector<48x128xf32>
    %160 = math.erf %159 : vector<48x128xf32>
    %cst_63 = arith.constant 1.000000e+00 : f32
    %161 = vector.broadcast %cst_63 : f32 to vector<48x128xf32>
    %162 = arith.addf %161, %160 : vector<48x128xf32>
    %163 = arith.mulf %157, %162 : vector<48x128xf32>
    %164 = arith.truncf %163 : vector<48x128xf32> to vector<48x128xbf16>
    %c0_64 = arith.constant 0 : index
    %c0_65 = arith.constant 0 : index
    %165 = vector.load %arg18[%c0_64, %c0_65] : memref<128x32xbf16, #tpu.memory_space<vmem>>, vector<128x32xbf16>
    %cst_66 = arith.constant dense<0.000000e+00> : vector<48x32xf32>
    %166 = tpu.matmul %164, %165, %cst_66 {dimension_numbers = #tpu.dot_dimension_numbers<[1], [0], [0], [1], [0, 0, 1, 1], [], []>} : vector<48x128xbf16>, vector<128x32xbf16>, vector<48x32xf32> -> vector<48x32xf32>
    %c0_67 = arith.constant 0 : index
    %c0_68 = arith.constant 0 : index
    %167 = vector.load %arg19[%c0_67, %c0_68] : memref<1x32xf32, #tpu.memory_space<vmem>>, vector<1x32xf32>
    %168 = vector.broadcast %167 : vector<1x32xf32> to vector<48x32xf32>
    %169 = arith.addf %166, %168 : vector<48x32xf32>
    %170 = arith.addf %149, %169 : vector<48x32xf32>
    %c0_69 = arith.constant 0 : index
    %c0_70 = arith.constant 0 : index
    %171 = vector.load %arg20[%c0_69, %c0_70] : memref<1x32xf32, #tpu.memory_space<vmem>>, vector<1x32xf32>
    %c0_71 = arith.constant 0 : index
    %c0_72 = arith.constant 0 : index
    %172 = vector.load %arg21[%c0_71, %c0_72] : memref<1x32xf32, #tpu.memory_space<vmem>>, vector<1x32xf32>
    %cst_73 = arith.constant dense<0.000000e+00> : vector<48xf32>
    %173 = vector.multi_reduction <add>, %170, %cst_73 [1] : vector<48x32xf32> to vector<48xf32>
    %174 = vector.shape_cast %173 : vector<48xf32> to vector<48x1xf32>
    %cst_74 = arith.constant 3.200000e+01 : f32
    %175 = vector.broadcast %cst_74 : f32 to vector<48x1xf32>
    %176 = arith.divf %174, %175 : vector<48x1xf32>
    %177 = vector.broadcast %176 : vector<48x1xf32> to vector<48x32xf32>
    %178 = arith.subf %170, %177 : vector<48x32xf32>
    %179 = arith.mulf %178, %178 : vector<48x32xf32>
    %cst_75 = arith.constant dense<0.000000e+00> : vector<48xf32>
    %180 = vector.multi_reduction <add>, %179, %cst_75 [1] : vector<48x32xf32> to vector<48xf32>
    %181 = vector.shape_cast %180 : vector<48xf32> to vector<48x1xf32>
    %cst_76 = arith.constant 3.200000e+01 : f32
    %182 = vector.broadcast %cst_76 : f32 to vector<48x1xf32>
    %183 = arith.divf %181, %182 : vector<48x1xf32>
    %cst_77 = arith.constant 9.99999974E-6 : f32
    %184 = vector.broadcast %cst_77 : f32 to vector<48x1xf32>
    %185 = arith.addf %183, %184 : vector<48x1xf32>
    %186 = math.rsqrt %185 : vector<48x1xf32>
    %187 = vector.broadcast %186 : vector<48x1xf32> to vector<48x32xf32>
    %188 = arith.mulf %178, %187 : vector<48x32xf32>
    %189 = vector.broadcast %171 : vector<1x32xf32> to vector<48x32xf32>
    %190 = arith.mulf %188, %189 : vector<48x32xf32>
    %191 = vector.broadcast %172 : vector<1x32xf32> to vector<48x32xf32>
    %192 = arith.addf %190, %191 : vector<48x32xf32>
    %193 = vector.extract_strided_slice %192 {offsets = [0, 0], sizes = [16, 32], strides = [1, 1]} : vector<48x32xf32> to vector<16x32xf32>
    %c0_78 = arith.constant 0 : index
    %c0_79 = arith.constant 0 : index
    %194 = vector.load %arg22[%c0_78, %c0_79] : memref<16x96xf32, #tpu.memory_space<vmem>>, vector<16x32xf32>
    tpu.vector_store %arg22[%c0_78, %c0_79], %193 {strides = array<i32>} : memref<16x96xf32, #tpu.memory_space<vmem>>, vector<16x32xf32>,
    %195 = vector.extract_strided_slice %192 {offsets = [16, 0], sizes = [16, 32], strides = [1, 1]} : vector<48x32xf32> to vector<16x32xf32>
    %c0_80 = arith.constant 0 : index
    %c32 = arith.constant 32 : index
    %196 = vector.load %arg22[%c0_80, %c32] : memref<16x96xf32, #tpu.memory_space<vmem>>, vector<16x32xf32>
    tpu.vector_store %arg22[%c0_80, %c32], %195 {strides = array<i32>} : memref<16x96xf32, #tpu.memory_space<vmem>>, vector<16x32xf32>,
    %197 = vector.extract_strided_slice %192 {offsets = [32, 0], sizes = [16, 32], strides = [1, 1]} : vector<48x32xf32> to vector<16x32xf32>
    %c0_81 = arith.constant 0 : index
    %c64 = arith.constant 64 : index
    %198 = vector.load %arg22[%c0_81, %c64] : memref<16x96xf32, #tpu.memory_space<vmem>>, vector<16x32xf32>
    tpu.vector_store %arg22[%c0_81, %c64], %197 {strides = array<i32>} : memref<16x96xf32, #tpu.memory_space<vmem>>, vector<16x32xf32>,
    return
  }
  func.func @transform_0(%arg0: i32) -> (i32, i32) {
    %c0_i32 = arith.constant 0 : i32
    %c0_i32_0 = arith.constant 0 : i32
    return %arg0, %c0_i32 : i32, i32
  }
  func.func @transform_1(%arg0: i32) -> (i32, i32) {
    %c0_i32 = arith.constant 0 : i32
    %c0_i32_0 = arith.constant 0 : i32
    return %arg0, %c0_i32 : i32, i32
  }
  func.func @transform_2(%arg0: i32) -> (i32, i32) {
    %c0_i32 = arith.constant 0 : i32
    %c0_i32_0 = arith.constant 0 : i32
    %c0_i32_1 = arith.constant 0 : i32
    return %c0_i32, %c0_i32_0 : i32, i32
  }
  func.func @transform_3(%arg0: i32) -> (i32, i32) {
    %c0_i32 = arith.constant 0 : i32
    %c0_i32_0 = arith.constant 0 : i32
    %c0_i32_1 = arith.constant 0 : i32
    return %c0_i32, %c0_i32_0 : i32, i32
  }
  func.func @transform_4(%arg0: i32) -> (i32, i32) {
    %c0_i32 = arith.constant 0 : i32
    %c0_i32_0 = arith.constant 0 : i32
    %c0_i32_1 = arith.constant 0 : i32
    return %c0_i32, %c0_i32_0 : i32, i32
  }
  func.func @transform_5(%arg0: i32) -> (i32, i32) {
    %c0_i32 = arith.constant 0 : i32
    %c0_i32_0 = arith.constant 0 : i32
    %c0_i32_1 = arith.constant 0 : i32
    return %c0_i32, %c0_i32_0 : i32, i32
  }
  func.func @transform_6(%arg0: i32) -> (i32, i32) {
    %c0_i32 = arith.constant 0 : i32
    %c0_i32_0 = arith.constant 0 : i32
    return %arg0, %c0_i32 : i32, i32
  }
  func.func @transform_7(%arg0: i32) -> (i32, i32) {
    %c0_i32 = arith.constant 0 : i32
    %c0_i32_0 = arith.constant 0 : i32
    %c0_i32_1 = arith.constant 0 : i32
    return %c0_i32, %c0_i32_0 : i32, i32
  }
  func.func @transform_8(%arg0: i32) -> (i32, i32) {
    %c0_i32 = arith.constant 0 : i32
    %c0_i32_0 = arith.constant 0 : i32
    %c0_i32_1 = arith.constant 0 : i32
    return %c0_i32, %c0_i32_0 : i32, i32
  }
  func.func @transform_9(%arg0: i32) -> (i32, i32) {
    %c0_i32 = arith.constant 0 : i32
    %c0_i32_0 = arith.constant 0 : i32
    %c0_i32_1 = arith.constant 0 : i32
    return %c0_i32, %c0_i32_0 : i32, i32
  }
  func.func @transform_10(%arg0: i32) -> (i32, i32) {
    %c0_i32 = arith.constant 0 : i32
    %c0_i32_0 = arith.constant 0 : i32
    %c0_i32_1 = arith.constant 0 : i32
    return %c0_i32, %c0_i32_0 : i32, i32
  }
  func.func @transform_11(%arg0: i32) -> (i32, i32) {
    %c0_i32 = arith.constant 0 : i32
    %c0_i32_0 = arith.constant 0 : i32
    %c0_i32_1 = arith.constant 0 : i32
    return %c0_i32, %c0_i32_0 : i32, i32
  }
  func.func @transform_12(%arg0: i32) -> (i32, i32) {
    %c0_i32 = arith.constant 0 : i32
    %c0_i32_0 = arith.constant 0 : i32
    %c0_i32_1 = arith.constant 0 : i32
    return %c0_i32, %c0_i32_0 : i32, i32
  }
  func.func @transform_13(%arg0: i32) -> (i32, i32) {
    %c0_i32 = arith.constant 0 : i32
    %c0_i32_0 = arith.constant 0 : i32
    %c0_i32_1 = arith.constant 0 : i32
    return %c0_i32, %c0_i32_0 : i32, i32
  }
  func.func @transform_14(%arg0: i32) -> (i32, i32) {
    %c0_i32 = arith.constant 0 : i32
    %c0_i32_0 = arith.constant 0 : i32
    %c0_i32_1 = arith.constant 0 : i32
    return %c0_i32, %c0_i32_0 : i32, i32
  }
  func.func @transform_15(%arg0: i32) -> (i32, i32) {
    %c0_i32 = arith.constant 0 : i32
    %c0_i32_0 = arith.constant 0 : i32
    %c0_i32_1 = arith.constant 0 : i32
    return %c0_i32, %c0_i32_0 : i32, i32
  }
  func.func @transform_16(%arg0: i32) -> (i32, i32) {
    %c0_i32 = arith.constant 0 : i32
    %c0_i32_0 = arith.constant 0 : i32
    %c0_i32_1 = arith.constant 0 : i32
    return %c0_i32, %c0_i32_0 : i32, i32
  }
  func.func @transform_17(%arg0: i32) -> (i32, i32) {
    %c0_i32 = arith.constant 0 : i32
    %c0_i32_0 = arith.constant 0 : i32
    %c0_i32_1 = arith.constant 0 : i32
    return %c0_i32, %c0_i32_0 : i32, i32
  }
  func.func @transform_18(%arg0: i32) -> (i32, i32) {
    %c0_i32 = arith.constant 0 : i32
    %c0_i32_0 = arith.constant 0 : i32
    %c0_i32_1 = arith.constant 0 : i32
    return %c0_i32, %c0_i32_0 : i32, i32
  }
  func.func @transform_19(%arg0: i32) -> (i32, i32) {
    %c0_i32 = arith.constant 0 : i32
    %c0_i32_0 = arith.constant 0 : i32
    %c0_i32_1 = arith.constant 0 : i32
    return %c0_i32, %c0_i32_0 : i32, i32
  }
  func.func @transform_20(%arg0: i32) -> (i32, i32) {
    %c0_i32 = arith.constant 0 : i32
    %c0_i32_0 = arith.constant 0 : i32
    %c0_i32_1 = arith.constant 0 : i32
    return %c0_i32, %c0_i32_0 : i32, i32
  }
  func.func @transform_21(%arg0: i32) -> (i32, i32) {
    %c0_i32 = arith.constant 0 : i32
    %c0_i32_0 = arith.constant 0 : i32
    return %arg0, %c0_i32 : i32, i32
  }
}

</mosaic_0001>

<llo_original>
// kernel: tpu_custom_call.1
$region0: #{tpu_custom_call.1}
  #allocation0 [shape = 'u32[]', space=smem, size = 0x4, offset = 0x4, fixed_abs, tag = 'smem constant byte address 0x4 - core index']
  #allocation1 [shape = 'u32[72,128]{1,0:T(1,128)}', space=vmem, size = 0x9000, scoped, tag = 'internal scratch']
  %s0 = inlined_call_operand.vmem [shape: bf16[16,16], index: 0, kind: input, shape index: {}]
  %s1 = inlined_call_operand.vmem [shape: bf16[16,24], index: 1, kind: input, shape index: {}]
  %s2 = inlined_call_operand.vmem [shape: bf16[16,32], index: 2, kind: input, shape index: {}]
  %s3 = inlined_call_operand.vmem [shape: bf16[24,32], index: 3, kind: input, shape index: {}]
  %s4 = inlined_call_operand.vmem [shape: f32[1,32], index: 4, kind: input, shape index: {}]
  %s5 = inlined_call_operand.vmem [shape: f32[1,32], index: 5, kind: input, shape index: {}]
  %s6 = inlined_call_operand.vmem [shape: f32[16,32], index: 6, kind: input, shape index: {}]
  %s7 = inlined_call_operand.vmem [shape: f32[32,4], index: 7, kind: input, shape index: {}]
  %s8 = inlined_call_operand.hbm [shape: f32[4,32], index: 8, kind: input, shape index: {}]
  %s9 = inlined_call_operand.vmem [shape: bf16[32,96], index: 9, kind: input, shape index: {}]
  %s10 = inlined_call_operand.vmem [shape: f32[1,96], index: 10, kind: input, shape index: {}]
  %s11 = inlined_call_operand.vmem [shape: bf16[32,32], index: 11, kind: input, shape index: {}]
  %s12 = inlined_call_operand.vmem [shape: f32[1,32], index: 12, kind: input, shape index: {}]
  %s13 = inlined_call_operand.vmem [shape: f32[1,32], index: 13, kind: input, shape index: {}]
  %s14 = inlined_call_operand.vmem [shape: f32[1,32], index: 14, kind: input, shape index: {}]
  %s15 = inlined_call_operand.vmem [shape: bf16[32,128], index: 15, kind: input, shape index: {}]
  %s16 = inlined_call_operand.vmem [shape: f32[1,128], index: 16, kind: input, shape index: {}]
  %s17 = inlined_call_operand.vmem [shape: bf16[128,32], index: 17, kind: input, shape index: {}]
  %s18 = inlined_call_operand.vmem [shape: f32[1,32], index: 18, kind: input, shape index: {}]
  %s19 = inlined_call_operand.vmem [shape: f32[1,32], index: 19, kind: input, shape index: {}]
  %s20 = inlined_call_operand.vmem [shape: f32[1,32], index: 20, kind: input, shape index: {}]
  %s21 = inlined_call_operand.hbm [shape: f32[16,96], index: 21, kind: output, shape index: {}]
  %s22 = sld [smem:[#allocation0]]
  $region98: #{tpu_custom_call.1} parent=0
    _
  %s24 = ssub.s32 1, %s22
  %s25 = scalar_select 0, %s24, %s22
  $region1: #{tpu_custom_call.1} parent=0
    #allocation2 [shape = 'u8[2048]{0}', space=vmem, size = 0x800, scoped, tag = 'input window, operand 8, single buffered']
    #allocation3 [shape = 's32[1]{0}', space=sflag, size = 0x4, scoped, tag = 'scoped memory for tpu_custom_call.1']
    #allocation4 [shape = 's32[1]{0}', space=sflag, size = 0x4, scoped, tag = 'scoped memory for tpu_custom_call.1']
    #allocation5 [shape = 'u8[8192]{0}', space=vmem, size = 0x2000, scoped, tag = 'output window, operand 0, single buffered']
    %26 = vsyncpa [#allocation3], 0
    %27 = vsyncpa [#allocation4], 0
    // Predicated region
    $region2: #{tpu_custom_call.1} parent=1 // pred_check
      _
    $region3: #{tpu_custom_call.1} parent=1 // pred_check_branch
      %29 = sbr.rel (0) target = $region5
    $region4: #{tpu_custom_call.1} parent=1 // pred_region
      _
    $region5: #{tpu_custom_call.1} parent=1 // pred_fallthru
      _
    // Predicated region
    $region6: #{tpu_custom_call.1} parent=1 // pred_check
      _
    $region7: #{tpu_custom_call.1} parent=1 // pred_check_branch
      %31 = sbr.rel (0) target = $region9
    $region8: #{tpu_custom_call.1} parent=1 // pred_region
      _
    $region9: #{tpu_custom_call.1} parent=1 // pred_fallthru
      _
    // Predicated region
    $region10: #{tpu_custom_call.1} parent=1 // pred_check
      _
    $region11: #{tpu_custom_call.1} parent=1 // pred_check_branch
      %33 = sbr.rel (0) target = $region13
    $region12: #{tpu_custom_call.1} parent=1 // pred_region
      _
    $region13: #{tpu_custom_call.1} parent=1 // pred_fallthru
      _
    // Predicated region
    $region14: #{tpu_custom_call.1} parent=1 // pred_check
      _
    $region15: #{tpu_custom_call.1} parent=1 // pred_check_branch
      %35 = sbr.rel (0) target = $region17
    $region16: #{tpu_custom_call.1} parent=1 // pred_region
      _
    $region17: #{tpu_custom_call.1} parent=1 // pred_fallthru
      _
    // Predicated region
    $region18: #{tpu_custom_call.1} parent=1 // pred_check
      _
    $region19: #{tpu_custom_call.1} parent=1 // pred_check_branch
      %37 = sbr.rel (0) target = $region21
    $region20: #{tpu_custom_call.1} parent=1 // pred_region
      _
    $region21: #{tpu_custom_call.1} parent=1 // pred_fallthru
      _
    // Predicated region
    $region22: #{tpu_custom_call.1} parent=1 // pred_check
      _
    $region23: #{tpu_custom_call.1} parent=1 // pred_check_branch
      %39 = sbr.rel (0) target = $region25
    $region24: #{tpu_custom_call.1} parent=1 // pred_region
      _
    $region25: #{tpu_custom_call.1} parent=1 // pred_fallthru
      _
    // Predicated region
    $region26: #{tpu_custom_call.1} parent=1 // pred_check
      _
    $region27: #{tpu_custom_call.1} parent=1 // pred_check_branch
      %41 = sbr.rel (0) target = $region29
    $region28: #{tpu_custom_call.1} parent=1 // pred_region
      _
    $region29: #{tpu_custom_call.1} parent=1 // pred_fallthru
      _
    // Predicated region
    $region30: #{tpu_custom_call.1} parent=1 // pred_check
      _
    $region31: #{tpu_custom_call.1} parent=1 // pred_check_branch
      %43 = sbr.rel (0) target = $region33
    $region32: #{tpu_custom_call.1} parent=1 // pred_region
      _
    $region33: #{tpu_custom_call.1} parent=1 // pred_fallthru
      _
    // Predicated region
    $region34: #{tpu_custom_call.1} parent=1 // pred_check
      _
    $region35: #{tpu_custom_call.1} parent=1 // pred_check_branch
      %45 = sbr.rel (0) target = $region37
    $region36: #{tpu_custom_call.1} parent=1 // pred_region
      %47 = vsyncadd [#allocation3], 0
      %s49 = sshll.u32 %s8, 4
      %s50 = int_to_ptr.hbm [resolvable:$true] %s49
      %s51 = sshll.u32 [#allocation2], 4
      %s52 = int_to_ptr.vmem [resolvable:$true] %s51
      %54 = dma.hbm_to_vmem [thread:$0]  %s50, 64, %s52, [#allocation3]
    $region37: #{tpu_custom_call.1} parent=1 // pred_fallthru
      _
    // Predicated region
    $region38: #{tpu_custom_call.1} parent=1 // pred_check
      _
    $region39: #{tpu_custom_call.1} parent=1 // pred_check_branch
      %56 = sbr.rel (0) target = $region41
    $region40: #{tpu_custom_call.1} parent=1 // pred_region
      _
    $region41: #{tpu_custom_call.1} parent=1 // pred_fallthru
      _
    // Predicated region
    $region42: #{tpu_custom_call.1} parent=1 // pred_check
      _
    $region43: #{tpu_custom_call.1} parent=1 // pred_check_branch
      %58 = sbr.rel (0) target = $region45
    $region44: #{tpu_custom_call.1} parent=1 // pred_region
      _
    $region45: #{tpu_custom_call.1} parent=1 // pred_fallthru
      _
    // Predicated region
    $region46: #{tpu_custom_call.1} parent=1 // pred_check
      _
    $region47: #{tpu_custom_call.1} parent=1 // pred_check_branch
      %60 = sbr.rel (0) target = $region49
    $region48: #{tpu_custom_call.1} parent=1 // pred_region
      _
    $region49: #{tpu_custom_call.1} parent=1 // pred_fallthru
      _
    // Predicated region
    $region50: #{tpu_custom_call.1} parent=1 // pred_check
      _
    $region51: #{tpu_custom_call.1} parent=1 // pred_check_branch
      %62 = sbr.rel (0) target = $region53
    $region52: #{tpu_custom_call.1} parent=1 // pred_region
      _
    $region53: #{tpu_custom_call.1} parent=1 // pred_fallthru
      _
    // Predicated region
    $region54: #{tpu_custom_call.1} parent=1 // pred_check
      _
    $region55: #{tpu_custom_call.1} parent=1 // pred_check_branch
      %64 = sbr.rel (0) target = $region57
    $region56: #{tpu_custom_call.1} parent=1 // pred_region
      _
    $region57: #{tpu_custom_call.1} parent=1 // pred_fallthru
      _
    // Predicated region
    $region58: #{tpu_custom_call.1} parent=1 // pred_check
      _
    $region59: #{tpu_custom_call.1} parent=1 // pred_check_branch
      %66 = sbr.rel (0) target = $region61
    $region60: #{tpu_custom_call.1} parent=1 // pred_region
      _
    $region61: #{tpu_custom_call.1} parent=1 // pred_fallthru
      _
    // Predicated region
    $region62: #{tpu_custom_call.1} parent=1 // pred_check
      _
    $region63: #{tpu_custom_call.1} parent=1 // pred_check_branch
      %68 = sbr.rel (0) target = $region65
    $region64: #{tpu_custom_call.1} parent=1 // pred_region
      _
    $region65: #{tpu_custom_call.1} parent=1 // pred_fallthru
      _
    // Predicated region
    $region66: #{tpu_custom_call.1} parent=1 // pred_check
      _
    $region67: #{tpu_custom_call.1} parent=1 // pred_check_branch
      %70 = sbr.rel (0) target = $region69
    $region68: #{tpu_custom_call.1} parent=1 // pred_region
      _
    $region69: #{tpu_custom_call.1} parent=1 // pred_fallthru
      _
    // Predicated region
    $region70: #{tpu_custom_call.1} parent=1 // pred_check
      _
    $region71: #{tpu_custom_call.1} parent=1 // pred_check_branch
      %72 = sbr.rel (0) target = $region73
    $region72: #{tpu_custom_call.1} parent=1 // pred_region
      _
    $region73: #{tpu_custom_call.1} parent=1 // pred_fallthru
      _
    // Predicated region
    $region74: #{tpu_custom_call.1} parent=1 // pred_check
      _
    $region75: #{tpu_custom_call.1} parent=1 // pred_check_branch
      %74 = sbr.rel (0) target = $region77
    $region76: #{tpu_custom_call.1} parent=1 // pred_region
      _
    $region77: #{tpu_custom_call.1} parent=1 // pred_fallthru
      _
    // Predicated region
    $region78: #{tpu_custom_call.1} parent=1 // pred_check
      _
    $region79: #{tpu_custom_call.1} parent=1 // pred_check_branch
      %76 = sbr.rel (0) target = $region81
    $region80: #{tpu_custom_call.1} parent=1 // pred_region
      _
    $region81: #{tpu_custom_call.1} parent=1 // pred_fallthru
      _
    // Predicated region
    $region82: #{tpu_custom_call.1} parent=1 // pred_check
      _
    $region83: #{tpu_custom_call.1} parent=1 // pred_check_branch
      %78 = sbr.rel (0) target = $region85
    $region84: #{tpu_custom_call.1} parent=1 // pred_region
      _
    $region85: #{tpu_custom_call.1} parent=1 // pred_fallthru
      _
    // Predicated region
    $region86: #{tpu_custom_call.1} parent=1 // pred_check
      _
    $region87: #{tpu_custom_call.1} parent=1 // pred_check_branch
      %80 = sbr.rel (0) target = $region89
    $region88: #{tpu_custom_call.1} parent=1 // pred_region
      %82 = dma.done [#allocation3], 64
    $region89: #{tpu_custom_call.1} parent=1 // pred_fallthru
      _
    %v84 = vld [vmem:[%s0] sm:$0xf]
    %v85 = vld [vmem:[%s0 + $0x4] sm:$0xf]
    %v86 = vld [vmem:[%s2] sm:$0xf]
    %v87 = vld [vmem:[%s2 + $0x4] sm:$0xf]
    %v88 = vld [vmem:[%s4] sm:$0x1]
    %v90 = vperm.slane %v88, 0
    %v94 = vunpack.c.l.b16 %v84
    %v95 = vunpack.c.l.b16 %v85
    %v96 = vpack.c.b16 %v95, %v94
    %v99 = vunpack.c.l.b16 %v86
    %v100 = vunpack.c.l.b16 %v87
    %v101 = vpack.c.b16 %v100, %v99
    %vm103 = vcmask 130048
    %v105 = vsel %vm103, %v96, 0
    %107 = vmatpush.bf16.msra.mxu0 0
    %108 = vmatpush.bf16.msra.mxu0 0
    %109 = vmatpush.bf16.msra.mxu0 0
    %110 = vmatpush.bf16.msra.mxu0 0
    %111 = vmatpush.bf16.msra.mxu0 0
    %112 = vmatpush.bf16.msra.mxu0 0
    %113 = vmatpush.bf16.msra.mxu0 0
    %114 = vmatpush.bf16.msra.mxu0 %v101
    %115 = vmatmul.bf16.gmra.mxu0 %v105
    %v116 = vpop.f32.mrf.mxu0
    %v117 = vadd.f32 %v90, %v116
    %v118 = vpop.f32.mrf.mxu0
    %v119 = vadd.f32 %v90, %v118
    %120 = vdwg.mxu0
    %v121 = vld [vmem:[%s1] sm:$0xf]
    %v122 = vld [vmem:[%s1 + $0x4] sm:$0xf]
    %v123 = vld [vmem:[%s3] sm:$0xf]
    %v124 = vld [vmem:[%s3 + $0x4] sm:$0xf]
    %v125 = vld [vmem:[%s3 + $0x8] sm:$0xf]
    %v126 = vld [vmem:[%s5] sm:$0x1]
    %v128 = vperm.slane %v126, 0
    %v132 = vunpack.c.l.b16 %v121
    %v133 = vunpack.c.l.b16 %v122
    %v134 = vpack.c.b16 %v133, %v132
    %v138 = vunpack.c.l.b16 %v123
    %v139 = vunpack.c.l.b16 %v124
    %v140 = vunpack.c.l.b16 %v125
    %v141 = vpack.c.b16 %v139, %v138
    %v142 = vpack.c.b16 %v140, %v140
    %vm144 = vcmask 195584
    %v146 = vsel %vm144, %v134, 0
    %vm148 = vcmask 1043456
    %v150 = vsel %vm148, %v142, 0
    %152 = vmatpush.bf16.msra.mxu0 0
    %153 = vmatpush.bf16.msra.mxu0 0
    %154 = vmatpush.bf16.msra.mxu0 0
    %155 = vmatpush.bf16.msra.mxu0 0
    %156 = vmatpush.bf16.msra.mxu0 0
    %157 = vmatpush.bf16.msra.mxu0 0
    %158 = vmatpush.bf16.msra.mxu0 %v150
    %159 = vmatpush.bf16.msra.mxu0 %v141
    %160 = vmatmul.bf16.gmra.mxu0 %v146
    %v161 = vpop.f32.mrf.mxu0
    %v162 = vadd.f32 %v128, %v161
    %v163 = vpop.f32.mrf.mxu0
    %v164 = vadd.f32 %v128, %v163
    %165 = vdwg.mxu0
    %v166 = vld [vmem:[%s6] sm:$0xff]
    %v167 = vld [vmem:[%s6 + $0x8] sm:$0xff]
    %v168 = vpack.c.bf16 %v119, %v117
    %v169 = vpack.c.bf16 %v164, %v162
    %v170 = vpack.c.bf16 %v167, %v166
    %v171 = vld [vmem:[%s9] sm:$0xf]
    %v172 = vld [vmem:[%s9 + $0x4] sm:$0xf]
    %v173 = vld [vmem:[%s9 + $0x8] sm:$0xf]
    %v174 = vld [vmem:[%s9 + $0xc] sm:$0xf]
    %v175 = vld [vmem:[%s10] sm:$0x1]
    %v177 = vperm.slane %v175, 0
    %v183 = vunpack.c.l.b16 %v171
    %v184 = vunpack.c.l.b16 %v172
    %v185 = vunpack.c.l.b16 %v173
    %v186 = vunpack.c.l.b16 %v174
    %v187 = vpack.c.b16 %v184, %v183
    %v188 = vpack.c.b16 %v186, %v185
    %vm191 = vcmask 261120
    %v193 = vsel %vm191, %v168, 0
    %v196 = vsel %vm191, %v169, 0
    %v199 = vsel %vm191, %v170, 0
    %201 = vmatpush.bf16.msra.mxu0 0
    %202 = vmatpush.bf16.msra.mxu0 0
    %203 = vmatpush.bf16.msra.mxu0 0
    %204 = vmatpush.bf16.msra.mxu0 0
    %205 = vmatpush.bf16.msra.mxu0 0
    %206 = vmatpush.bf16.msra.mxu0 0
    %207 = vmatpush.bf16.msra.mxu0 %v188
    %208 = vmatpush.bf16.msra.mxu0 %v187
    %209 = vmatmul.bf16.gmra.mxu0 %v193
    %v210 = vpop.f32.mrf.mxu0
    %v211 = vadd.f32 %v177, %v210
    %v212 = vpop.f32.mrf.mxu0
    %v213 = vadd.f32 %v177, %v212
    %214 = vmatmul.bf16.gmra.mxu0 %v196
    %v215 = vpop.f32.mrf.mxu0
    %v216 = vadd.f32 %v177, %v215
    %v217 = vpop.f32.mrf.mxu0
    %v218 = vadd.f32 %v177, %v217
    %219 = vmatmul.bf16.gmra.mxu0 %v199
    %v220 = vpop.f32.mrf.mxu0
    %v221 = vadd.f32 %v177, %v220
    %v222 = vpop.f32.mrf.mxu0
    %v223 = vadd.f32 %v177, %v222
    %224 = vdwg.mxu0
    %v225 = vmul.f32 %v211, 0.35355338
    %v226 = vmul.f32 %v213, 0.35355338
    %v227 = vmul.f32 %v216, 0.35355338
    %v228 = vmul.f32 %v218, 0.35355338
    %v229 = vmul.f32 %v221, 0.35355338
    %v230 = vmul.f32 %v223, 0.35355338
    %v231 = vld [vmem:[%s7] sm:$0xff]
    %v232 = vld [vmem:[%s7 + $0x8] sm:$0xff]
    %v233 = vld [vmem:[%s7 + $0x10] sm:$0xff]
    %v234 = vld [vmem:[%s7 + $0x18] sm:$0xff]
    %v235 = vld [vmem:[#allocation2] sm:$0xf]
    %238 = vrot.lane.b32.xlu0 %v211, 96
    %v239 = vpop.permute.xlu0 %238
    %240 = vrot.lane.b32.xlu0 %v213, 96
    %v241 = vpop.permute.xlu0 %240
    %v244 = vmul.f32 %v225, %v239
    %v245 = vmul.f32 %v226, %v241
    %v247 = vsel %vm191, %v244, 0
    %v250 = vsel %vm191, %v245, 0
    %252 = vmatpush.msra.mxu0 0.0
    %253 = vmatpush.msra.mxu0 0.0
    %254 = vmatpush.msra.mxu0 0.0
    %255 = vmatpush.msra.mxu0 0.0
    %256 = vmatpush.msra.mxu0 0.0
    %257 = vmatpush.msra.mxu0 0.0
    %258 = vmatpush.msra.mxu0 0.0
    %259 = vmatpush.msra.mxu0 0.0
    %260 = vmatpush.msra.mxu0 0.0
    %261 = vmatpush.msra.mxu0 0.0
    %262 = vmatpush.msra.mxu0 0.0
    %263 = vmatpush.msra.mxu0 0.0
    %264 = vmatpush.msra.mxu0 %v234
    %265 = vmatpush.msra.mxu0 %v233
    %266 = vmatpush.msra.mxu0 %v232
    %267 = vmatpush.msra.mxu0 %v231
    %268 = vmatmul.f32.gmra.mxu0 %v247
    %v269 = vpop.f32.mrf.mxu0
    %v270 = vadd.f32 0.0, %v269
    %271 = vmatmul.f32.gmra.mxu0 %v250
    %v272 = vpop.f32.mrf.mxu0
    %v273 = vadd.f32 0.0, %v272
    %274 = vdwg.mxu0
    %277 = vrot.lane.b32.xlu0 %v216, 96
    %v278 = vpop.permute.xlu0 %277
    %279 = vrot.lane.b32.xlu0 %v218, 96
    %v280 = vpop.permute.xlu0 %279
    %v283 = vmul.f32 %v225, %v278
    %v284 = vmul.f32 %v226, %v280
    %v286 = vsel %vm191, %v283, 0
    %v289 = vsel %vm191, %v284, 0
    %291 = vmatpush.msra.mxu0 0.0
    %292 = vmatpush.msra.mxu0 0.0
    %293 = vmatpush.msra.mxu0 0.0
    %294 = vmatpush.msra.mxu0 0.0
    %295 = vmatpush.msra.mxu0 0.0
    %296 = vmatpush.msra.mxu0 0.0
    %297 = vmatpush.msra.mxu0 0.0
    %298 = vmatpush.msra.mxu0 0.0
    %299 = vmatpush.msra.mxu0 0.0
    %300 = vmatpush.msra.mxu0 0.0
    %301 = vmatpush.msra.mxu0 0.0
    %302 = vmatpush.msra.mxu0 0.0
    %303 = vmatpush.msra.mxu0 %v234
    %304 = vmatpush.msra.mxu0 %v233
    %305 = vmatpush.msra.mxu0 %v232
    %306 = vmatpush.msra.mxu0 %v231
    %307 = vmatmul.f32.gmra.mxu0 %v286
    %v308 = vpop.f32.mrf.mxu0
    %v309 = vadd.f32 0.0, %v308
    %310 = vmatmul.f32.gmra.mxu0 %v289
    %v311 = vpop.f32.mrf.mxu0
    %v312 = vadd.f32 0.0, %v311
    %313 = vdwg.mxu0
    %316 = vrot.lane.b32.xlu0 %v221, 96
    %v317 = vpop.permute.xlu0 %316
    %318 = vrot.lane.b32.xlu0 %v223, 96
    %v319 = vpop.permute.xlu0 %318
    %v322 = vmul.f32 %v225, %v317
    %v323 = vmul.f32 %v226, %v319
    %v325 = vsel %vm191, %v322, 0
    %v328 = vsel %vm191, %v323, 0
    %330 = vmatpush.msra.mxu0 0.0
    %331 = vmatpush.msra.mxu0 0.0
    %332 = vmatpush.msra.mxu0 0.0
    %333 = vmatpush.msra.mxu0 0.0
    %334 = vmatpush.msra.mxu0 0.0
    %335 = vmatpush.msra.mxu0 0.0
    %336 = vmatpush.msra.mxu0 0.0
    %337 = vmatpush.msra.mxu0 0.0
    %338 = vmatpush.msra.mxu0 0.0
    %339 = vmatpush.msra.mxu0 0.0
    %340 = vmatpush.msra.mxu0 0.0
    %341 = vmatpush.msra.mxu0 0.0
    %342 = vmatpush.msra.mxu0 %v234
    %343 = vmatpush.msra.mxu0 %v233
    %344 = vmatpush.msra.mxu0 %v232
    %345 = vmatpush.msra.mxu0 %v231
    %346 = vmatmul.f32.gmra.mxu0 %v325
    %v347 = vpop.f32.mrf.mxu0
    %v348 = vadd.f32 0.0, %v347
    %349 = vmatmul.f32.gmra.mxu0 %v328
    %v350 = vpop.f32.mrf.mxu0
    %v351 = vadd.f32 0.0, %v350
    %352 = vdwg.mxu0
    %v353 = vmax.f32 %v270, %v309
    %v354 = vmax.f32 %v273, %v312
    %v355 = vmax.f32 %v353, %v348
    %v356 = vmax.f32 %v354, %v351
    %v357 = vsub.f32 %v270, %v355
    %v358 = vsub.f32 %v273, %v356
    %v359 = vmul.f32 %v357, 1.442695
    %v360 = vpow.pop %v359
    %v361 = vmul.f32 %v358, 1.442695
    %v362 = vpow.pop %v361
    %v363 = vsub.f32 %v309, %v355
    %v364 = vsub.f32 %v312, %v356
    %v365 = vmul.f32 %v363, 1.442695
    %v366 = vpow.pop %v365
    %v367 = vmul.f32 %v364, 1.442695
    %v368 = vpow.pop %v367
    %v369 = vsub.f32 %v348, %v355
    %v370 = vsub.f32 %v351, %v356
    %v371 = vmul.f32 %v369, 1.442695
    %v372 = vpow.pop %v371
    %v373 = vmul.f32 %v370, 1.442695
    %v374 = vpow.pop %v373
    %v375 = vadd.f32 %v360, %v366
    %v376 = vadd.f32 %v362, %v368
    %v377 = vadd.f32 %v375, %v372
    %v378 = vadd.f32 %v376, %v374
    %v379 = vrcp.pop %v377
    %v380 = vrcp.pop %v378
    %v381 = vmul.f32 %v360, %v379
    %v382 = vmul.f32 %v362, %v380
    %vm383 = vcmask 31744
    %v385 = vsel %vm383, %v381, 0
    %v388 = vsel %vm383, %v382, 0
    %v391 = vsel %vm148, %v235, 0
    %393 = vmatpush.msra.mxu0 0.0
    %394 = vmatpush.msra.mxu0 0.0
    %395 = vmatpush.msra.mxu0 0.0
    %396 = vmatpush.msra.mxu0 0.0
    %397 = vmatpush.msra.mxu0 0.0
    %398 = vmatpush.msra.mxu0 0.0
    %399 = vmatpush.msra.mxu0 0.0
    %400 = vmatpush.msra.mxu0 0.0
    %401 = vmatpush.msra.mxu0 0.0
    %402 = vmatpush.msra.mxu0 0.0
    %403 = vmatpush.msra.mxu0 0.0
    %404 = vmatpush.msra.mxu0 0.0
    %405 = vmatpush.msra.mxu0 0.0
    %406 = vmatpush.msra.mxu0 0.0
    %407 = vmatpush.msra.mxu0 0.0
    %408 = vmatpush.msra.mxu0 %v391
    %409 = vmatmul.f32.gmra.mxu0 %v385
    %v410 = vpop.f32.mrf.mxu0
    %v411 = vadd.f32 0.0, %v410
    %412 = vmatmul.f32.gmra.mxu0 %v388
    %v413 = vpop.f32.mrf.mxu0
    %v414 = vadd.f32 0.0, %v413
    %415 = vdwg.mxu0
    %416 = vrot.lane.b32.xlu0 %v211, 64
    %v417 = vpop.permute.xlu0 %416
    %418 = vrot.lane.b32.xlu0 %v213, 64
    %v419 = vpop.permute.xlu0 %418
    %v422 = vmul.f32 %v411, %v417
    %v423 = vmul.f32 %v414, %v419
    %v424 = vmul.f32 %v366, %v379
    %v425 = vmul.f32 %v368, %v380
    %v427 = vsel %vm383, %v424, 0
    %v430 = vsel %vm383, %v425, 0
    %432 = vmatpush.msra.mxu0 0.0
    %433 = vmatpush.msra.mxu0 0.0
    %434 = vmatpush.msra.mxu0 0.0
    %435 = vmatpush.msra.mxu0 0.0
    %436 = vmatpush.msra.mxu0 0.0
    %437 = vmatpush.msra.mxu0 0.0
    %438 = vmatpush.msra.mxu0 0.0
    %439 = vmatpush.msra.mxu0 0.0
    %440 = vmatpush.msra.mxu0 0.0
    %441 = vmatpush.msra.mxu0 0.0
    %442 = vmatpush.msra.mxu0 0.0
    %443 = vmatpush.msra.mxu0 0.0
    %444 = vmatpush.msra.mxu0 0.0
    %445 = vmatpush.msra.mxu0 0.0
    %446 = vmatpush.msra.mxu0 0.0
    %447 = vmatpush.msra.mxu0 %v391
    %448 = vmatmul.f32.gmra.mxu0 %v427
    %v449 = vpop.f32.mrf.mxu0
    %v450 = vadd.f32 0.0, %v449
    %451 = vmatmul.f32.gmra.mxu0 %v430
    %v452 = vpop.f32.mrf.mxu0
    %v453 = vadd.f32 0.0, %v452
    %454 = vdwg.mxu0
    %455 = vrot.lane.b32.xlu0 %v216, 64
    %v456 = vpop.permute.xlu0 %455
    %457 = vrot.lane.b32.xlu0 %v218, 64
    %v458 = vpop.permute.xlu0 %457
    %v461 = vmul.f32 %v450, %v456
    %v462 = vmul.f32 %v453, %v458
    %v463 = vadd.f32 %v422, %v461
    %v464 = vadd.f32 %v423, %v462
    %v465 = vmul.f32 %v372, %v379
    %v466 = vmul.f32 %v374, %v380
    %v468 = vsel %vm383, %v465, 0
    %v471 = vsel %vm383, %v466, 0
    %473 = vmatpush.msra.mxu0 0.0
    %474 = vmatpush.msra.mxu0 0.0
    %475 = vmatpush.msra.mxu0 0.0
    %476 = vmatpush.msra.mxu0 0.0
    %477 = vmatpush.msra.mxu0 0.0
    %478 = vmatpush.msra.mxu0 0.0
    %479 = vmatpush.msra.mxu0 0.0
    %480 = vmatpush.msra.mxu0 0.0
    %481 = vmatpush.msra.mxu0 0.0
    %482 = vmatpush.msra.mxu0 0.0
    %483 = vmatpush.msra.mxu0 0.0
    %484 = vmatpush.msra.mxu0 0.0
    %485 = vmatpush.msra.mxu0 0.0
    %486 = vmatpush.msra.mxu0 0.0
    %487 = vmatpush.msra.mxu0 0.0
    %488 = vmatpush.msra.mxu0 %v391
    %489 = vmatmul.f32.gmra.mxu0 %v468
    %v490 = vpop.f32.mrf.mxu0
    %v491 = vadd.f32 0.0, %v490
    %492 = vmatmul.f32.gmra.mxu0 %v471
    %v493 = vpop.f32.mrf.mxu0
    %v494 = vadd.f32 0.0, %v493
    %495 = vdwg.mxu0
    %496 = vrot.lane.b32.xlu0 %v221, 64
    %v497 = vpop.permute.xlu0 %496
    %498 = vrot.lane.b32.xlu0 %v223, 64
    %v499 = vpop.permute.xlu0 %498
    %v502 = vmul.f32 %v491, %v497
    %v503 = vmul.f32 %v494, %v499
    %v504 = vadd.f32 %v463, %v502
    %v505 = vadd.f32 %v464, %v503
    %v506 = vmul.f32 %v227, %v239
    %v507 = vmul.f32 %v228, %v241
    %v509 = vsel %vm191, %v506, 0
    %v512 = vsel %vm191, %v507, 0
    %514 = vmatpush.msra.mxu0 0.0
    %515 = vmatpush.msra.mxu0 0.0
    %516 = vmatpush.msra.mxu0 0.0
    %517 = vmatpush.msra.mxu0 0.0
    %518 = vmatpush.msra.mxu0 0.0
    %519 = vmatpush.msra.mxu0 0.0
    %520 = vmatpush.msra.mxu0 0.0
    %521 = vmatpush.msra.mxu0 0.0
    %522 = vmatpush.msra.mxu0 0.0
    %523 = vmatpush.msra.mxu0 0.0
    %524 = vmatpush.msra.mxu0 0.0
    %525 = vmatpush.msra.mxu0 0.0
    %526 = vmatpush.msra.mxu0 %v234
    %527 = vmatpush.msra.mxu0 %v233
    %528 = vmatpush.msra.mxu0 %v232
    %529 = vmatpush.msra.mxu0 %v231
    %530 = vmatmul.f32.gmra.mxu0 %v509
    %v531 = vpop.f32.mrf.mxu0
    %v532 = vadd.f32 0.0, %v531
    %533 = vmatmul.f32.gmra.mxu0 %v512
    %v534 = vpop.f32.mrf.mxu0
    %v535 = vadd.f32 0.0, %v534
    %536 = vdwg.mxu0
    %v537 = vmul.f32 %v227, %v278
    %v538 = vmul.f32 %v228, %v280
    %v540 = vsel %vm191, %v537, 0
    %v543 = vsel %vm191, %v538, 0
    %545 = vmatpush.msra.mxu0 0.0
    %546 = vmatpush.msra.mxu0 0.0
    %547 = vmatpush.msra.mxu0 0.0
    %548 = vmatpush.msra.mxu0 0.0
    %549 = vmatpush.msra.mxu0 0.0
    %550 = vmatpush.msra.mxu0 0.0
    %551 = vmatpush.msra.mxu0 0.0
    %552 = vmatpush.msra.mxu0 0.0
    %553 = vmatpush.msra.mxu0 0.0
    %554 = vmatpush.msra.mxu0 0.0
    %555 = vmatpush.msra.mxu0 0.0
    %556 = vmatpush.msra.mxu0 0.0
    %557 = vmatpush.msra.mxu0 %v234
    %558 = vmatpush.msra.mxu0 %v233
    %559 = vmatpush.msra.mxu0 %v232
    %560 = vmatpush.msra.mxu0 %v231
    %561 = vmatmul.f32.gmra.mxu0 %v540
    %v562 = vpop.f32.mrf.mxu0
    %v563 = vadd.f32 0.0, %v562
    %564 = vmatmul.f32.gmra.mxu0 %v543
    %v565 = vpop.f32.mrf.mxu0
    %v566 = vadd.f32 0.0, %v565
    %567 = vdwg.mxu0
    %v568 = vmul.f32 %v227, %v317
    %v569 = vmul.f32 %v228, %v319
    %v571 = vsel %vm191, %v568, 0
    %v574 = vsel %vm191, %v569, 0
    %576 = vmatpush.msra.mxu0 0.0
    %577 = vmatpush.msra.mxu0 0.0
    %578 = vmatpush.msra.mxu0 0.0
    %579 = vmatpush.msra.mxu0 0.0
    %580 = vmatpush.msra.mxu0 0.0
    %581 = vmatpush.msra.mxu0 0.0
    %582 = vmatpush.msra.mxu0 0.0
    %583 = vmatpush.msra.mxu0 0.0
    %584 = vmatpush.msra.mxu0 0.0
    %585 = vmatpush.msra.mxu0 0.0
    %586 = vmatpush.msra.mxu0 0.0
    %587 = vmatpush.msra.mxu0 0.0
    %588 = vmatpush.msra.mxu0 %v234
    %589 = vmatpush.msra.mxu0 %v233
    %590 = vmatpush.msra.mxu0 %v232
    %591 = vmatpush.msra.mxu0 %v231
    %592 = vmatmul.f32.gmra.mxu0 %v571
    %v593 = vpop.f32.mrf.mxu0
    %v594 = vadd.f32 0.0, %v593
    %595 = vmatmul.f32.gmra.mxu0 %v574
    %v596 = vpop.f32.mrf.mxu0
    %v597 = vadd.f32 0.0, %v596
    %598 = vdwg.mxu0
    %v599 = vmax.f32 %v532, %v563
    %v600 = vmax.f32 %v535, %v566
    %v601 = vmax.f32 %v599, %v594
    %v602 = vmax.f32 %v600, %v597
    %v603 = vsub.f32 %v532, %v601
    %v604 = vsub.f32 %v535, %v602
    %v605 = vmul.f32 %v603, 1.442695
    %v606 = vpow.pop %v605
    %v607 = vmul.f32 %v604, 1.442695
    %v608 = vpow.pop %v607
    %v609 = vsub.f32 %v563, %v601
    %v610 = vsub.f32 %v566, %v602
    %v611 = vmul.f32 %v609, 1.442695
    %v612 = vpow.pop %v611
    %v613 = vmul.f32 %v610, 1.442695
    %v614 = vpow.pop %v613
    %v615 = vsub.f32 %v594, %v601
    %v616 = vsub.f32 %v597, %v602
    %v617 = vmul.f32 %v615, 1.442695
    %v618 = vpow.pop %v617
    %v619 = vmul.f32 %v616, 1.442695
    %v620 = vpow.pop %v619
    %v621 = vadd.f32 %v606, %v612
    %v622 = vadd.f32 %v608, %v614
    %v623 = vadd.f32 %v621, %v618
    %v624 = vadd.f32 %v622, %v620
    %v625 = vrcp.pop %v623
    %v626 = vrcp.pop %v624
    %v627 = vmul.f32 %v606, %v625
    %v628 = vmul.f32 %v608, %v626
    %v630 = vsel %vm383, %v627, 0
    %v633 = vsel %vm383, %v628, 0
    %635 = vmatpush.msra.mxu0 0.0
    %636 = vmatpush.msra.mxu0 0.0
    %637 = vmatpush.msra.mxu0 0.0
    %638 = vmatpush.msra.mxu0 0.0
    %639 = vmatpush.msra.mxu0 0.0
    %640 = vmatpush.msra.mxu0 0.0
    %641 = vmatpush.msra.mxu0 0.0
    %642 = vmatpush.msra.mxu0 0.0
    %643 = vmatpush.msra.mxu0 0.0
    %644 = vmatpush.msra.mxu0 0.0
    %645 = vmatpush.msra.mxu0 0.0
    %646 = vmatpush.msra.mxu0 0.0
    %647 = vmatpush.msra.mxu0 0.0
    %648 = vmatpush.msra.mxu0 0.0
    %649 = vmatpush.msra.mxu0 0.0
    %650 = vmatpush.msra.mxu0 %v391
    %651 = vmatmul.f32.gmra.mxu0 %v630
    %v652 = vpop.f32.mrf.mxu0
    %v653 = vadd.f32 0.0, %v652
    %654 = vmatmul.f32.gmra.mxu0 %v633
    %v655 = vpop.f32.mrf.mxu0
    %v656 = vadd.f32 0.0, %v655
    %657 = vdwg.mxu0
    %v658 = vmul.f32 %v653, %v417
    %v659 = vmul.f32 %v656, %v419
    %v660 = vmul.f32 %v612, %v625
    %v661 = vmul.f32 %v614, %v626
    %v663 = vsel %vm383, %v660, 0
    %v666 = vsel %vm383, %v661, 0
    %668 = vmatpush.msra.mxu0 0.0
    %669 = vmatpush.msra.mxu0 0.0
    %670 = vmatpush.msra.mxu0 0.0
    %671 = vmatpush.msra.mxu0 0.0
    %672 = vmatpush.msra.mxu0 0.0
    %673 = vmatpush.msra.mxu0 0.0
    %674 = vmatpush.msra.mxu0 0.0
    %675 = vmatpush.msra.mxu0 0.0
    %676 = vmatpush.msra.mxu0 0.0
    %677 = vmatpush.msra.mxu0 0.0
    %678 = vmatpush.msra.mxu0 0.0
    %679 = vmatpush.msra.mxu0 0.0
    %680 = vmatpush.msra.mxu0 0.0
    %681 = vmatpush.msra.mxu0 0.0
    %682 = vmatpush.msra.mxu0 0.0
    %683 = vmatpush.msra.mxu0 %v391
    %684 = vmatmul.f32.gmra.mxu0 %v663
    %v685 = vpop.f32.mrf.mxu0
    %v686 = vadd.f32 0.0, %v685
    %687 = vmatmul.f32.gmra.mxu0 %v666
    %v688 = vpop.f32.mrf.mxu0
    %v689 = vadd.f32 0.0, %v688
    %690 = vdwg.mxu0
    %v691 = vmul.f32 %v686, %v456
    %v692 = vmul.f32 %v689, %v458
    %v693 = vadd.f32 %v658, %v691
    %v694 = vadd.f32 %v659, %v692
    %v695 = vmul.f32 %v618, %v625
    %v696 = vmul.f32 %v620, %v626
    %v698 = vsel %vm383, %v695, 0
    %v701 = vsel %vm383, %v696, 0
    %703 = vmatpush.msra.mxu0 0.0
    %704 = vmatpush.msra.mxu0 0.0
    %705 = vmatpush.msra.mxu0 0.0
    %706 = vmatpush.msra.mxu0 0.0
    %707 = vmatpush.msra.mxu0 0.0
    %708 = vmatpush.msra.mxu0 0.0
    %709 = vmatpush.msra.mxu0 0.0
    %710 = vmatpush.msra.mxu0 0.0
    %711 = vmatpush.msra.mxu0 0.0
    %712 = vmatpush.msra.mxu0 0.0
    %713 = vmatpush.msra.mxu0 0.0
    %714 = vmatpush.msra.mxu0 0.0
    %715 = vmatpush.msra.mxu0 0.0
    %716 = vmatpush.msra.mxu0 0.0
    %717 = vmatpush.msra.mxu0 0.0
    %718 = vmatpush.msra.mxu0 %v391
    %719 = vmatmul.f32.gmra.mxu0 %v698
    %v720 = vpop.f32.mrf.mxu0
    %v721 = vadd.f32 0.0, %v720
    %722 = vmatmul.f32.gmra.mxu0 %v701
    %v723 = vpop.f32.mrf.mxu0
    %v724 = vadd.f32 0.0, %v723
    %725 = vdwg.mxu0
    %v726 = vmul.f32 %v721, %v497
    %v727 = vmul.f32 %v724, %v499
    %v728 = vadd.f32 %v693, %v726
    %v729 = vadd.f32 %v694, %v727
    %v730 = vmul.f32 %v229, %v239
    %v731 = vmul.f32 %v230, %v241
    %v733 = vsel %vm191, %v730, 0
    %v736 = vsel %vm191, %v731, 0
    %738 = vmatpush.msra.mxu0 0.0
    %739 = vmatpush.msra.mxu0 0.0
    %740 = vmatpush.msra.mxu0 0.0
    %741 = vmatpush.msra.mxu0 0.0
    %742 = vmatpush.msra.mxu0 0.0
    %743 = vmatpush.msra.mxu0 0.0
    %744 = vmatpush.msra.mxu0 0.0
    %745 = vmatpush.msra.mxu0 0.0
    %746 = vmatpush.msra.mxu0 0.0
    %747 = vmatpush.msra.mxu0 0.0
    %748 = vmatpush.msra.mxu0 0.0
    %749 = vmatpush.msra.mxu0 0.0
    %750 = vmatpush.msra.mxu0 %v234
    %751 = vmatpush.msra.mxu0 %v233
    %752 = vmatpush.msra.mxu0 %v232
    %753 = vmatpush.msra.mxu0 %v231
    %754 = vmatmul.f32.gmra.mxu0 %v733
    %v755 = vpop.f32.mrf.mxu0
    %v756 = vadd.f32 0.0, %v755
    %757 = vmatmul.f32.gmra.mxu0 %v736
    %v758 = vpop.f32.mrf.mxu0
    %v759 = vadd.f32 0.0, %v758
    %760 = vdwg.mxu0
    %v761 = vmul.f32 %v229, %v278
    %v762 = vmul.f32 %v230, %v280
    %v764 = vsel %vm191, %v761, 0
    %v767 = vsel %vm191, %v762, 0
    %769 = vmatpush.msra.mxu0 0.0
    %770 = vmatpush.msra.mxu0 0.0
    %771 = vmatpush.msra.mxu0 0.0
    %772 = vmatpush.msra.mxu0 0.0
    %773 = vmatpush.msra.mxu0 0.0
    %774 = vmatpush.msra.mxu0 0.0
    %775 = vmatpush.msra.mxu0 0.0
    %776 = vmatpush.msra.mxu0 0.0
    %777 = vmatpush.msra.mxu0 0.0
    %778 = vmatpush.msra.mxu0 0.0
    %779 = vmatpush.msra.mxu0 0.0
    %780 = vmatpush.msra.mxu0 0.0
    %781 = vmatpush.msra.mxu0 %v234
    %782 = vmatpush.msra.mxu0 %v233
    %783 = vmatpush.msra.mxu0 %v232
    %784 = vmatpush.msra.mxu0 %v231
    %785 = vmatmul.f32.gmra.mxu0 %v764
    %v786 = vpop.f32.mrf.mxu0
    %v787 = vadd.f32 0.0, %v786
    %788 = vmatmul.f32.gmra.mxu0 %v767
    %v789 = vpop.f32.mrf.mxu0
    %v790 = vadd.f32 0.0, %v789
    %791 = vdwg.mxu0
    %v792 = vmul.f32 %v229, %v317
    %v793 = vmul.f32 %v230, %v319
    %v795 = vsel %vm191, %v792, 0
    %v798 = vsel %vm191, %v793, 0
    %800 = vmatpush.msra.mxu0 0.0
    %801 = vmatpush.msra.mxu0 0.0
    %802 = vmatpush.msra.mxu0 0.0
    %803 = vmatpush.msra.mxu0 0.0
    %804 = vmatpush.msra.mxu0 0.0
    %805 = vmatpush.msra.mxu0 0.0
    %806 = vmatpush.msra.mxu0 0.0
    %807 = vmatpush.msra.mxu0 0.0
    %808 = vmatpush.msra.mxu0 0.0
    %809 = vmatpush.msra.mxu0 0.0
    %810 = vmatpush.msra.mxu0 0.0
    %811 = vmatpush.msra.mxu0 0.0
    %812 = vmatpush.msra.mxu0 %v234
    %813 = vmatpush.msra.mxu0 %v233
    %814 = vmatpush.msra.mxu0 %v232
    %815 = vmatpush.msra.mxu0 %v231
    %816 = vmatmul.f32.gmra.mxu0 %v795
    %v817 = vpop.f32.mrf.mxu0
    %v818 = vadd.f32 0.0, %v817
    %819 = vmatmul.f32.gmra.mxu0 %v798
    %v820 = vpop.f32.mrf.mxu0
    %v821 = vadd.f32 0.0, %v820
    %822 = vdwg.mxu0
    %v823 = vmax.f32 %v756, %v787
    %v824 = vmax.f32 %v759, %v790
    %v825 = vmax.f32 %v823, %v818
    %v826 = vmax.f32 %v824, %v821
    %v827 = vsub.f32 %v756, %v825
    %v828 = vsub.f32 %v759, %v826
    %v829 = vmul.f32 %v827, 1.442695
    %v830 = vpow.pop %v829
    %v831 = vmul.f32 %v828, 1.442695
    %v832 = vpow.pop %v831
    %v833 = vsub.f32 %v787, %v825
    %v834 = vsub.f32 %v790, %v826
    %v835 = vmul.f32 %v833, 1.442695
    %v836 = vpow.pop %v835
    %v837 = vmul.f32 %v834, 1.442695
    %v838 = vpow.pop %v837
    %v839 = vsub.f32 %v818, %v825
    %v840 = vsub.f32 %v821, %v826
    %v841 = vmul.f32 %v839, 1.442695
    %v842 = vpow.pop %v841
    %v843 = vmul.f32 %v840, 1.442695
    %v844 = vpow.pop %v843
    %v845 = vadd.f32 %v830, %v836
    %v846 = vadd.f32 %v832, %v838
    %v847 = vadd.f32 %v845, %v842
    %v848 = vadd.f32 %v846, %v844
    %v849 = vrcp.pop %v847
    %v850 = vrcp.pop %v848
    %v851 = vmul.f32 %v830, %v849
    %v852 = vmul.f32 %v832, %v850
    %v854 = vsel %vm383, %v851, 0
    %v857 = vsel %vm383, %v852, 0
    %859 = vmatpush.msra.mxu0 0.0
    %860 = vmatpush.msra.mxu0 0.0
    %861 = vmatpush.msra.mxu0 0.0
    %862 = vmatpush.msra.mxu0 0.0
    %863 = vmatpush.msra.mxu0 0.0
    %864 = vmatpush.msra.mxu0 0.0
    %865 = vmatpush.msra.mxu0 0.0
    %866 = vmatpush.msra.mxu0 0.0
    %867 = vmatpush.msra.mxu0 0.0
    %868 = vmatpush.msra.mxu0 0.0
    %869 = vmatpush.msra.mxu0 0.0
    %870 = vmatpush.msra.mxu0 0.0
    %871 = vmatpush.msra.mxu0 0.0
    %872 = vmatpush.msra.mxu0 0.0
    %873 = vmatpush.msra.mxu0 0.0
    %874 = vmatpush.msra.mxu0 %v391
    %875 = vmatmul.f32.gmra.mxu0 %v854
    %v876 = vpop.f32.mrf.mxu0
    %v877 = vadd.f32 0.0, %v876
    %878 = vmatmul.f32.gmra.mxu0 %v857
    %v879 = vpop.f32.mrf.mxu0
    %v880 = vadd.f32 0.0, %v879
    %881 = vdwg.mxu0
    %v882 = vmul.f32 %v877, %v417
    %v883 = vmul.f32 %v880, %v419
    %v884 = vmul.f32 %v836, %v849
    %v885 = vmul.f32 %v838, %v850
    %v887 = vsel %vm383, %v884, 0
    %v890 = vsel %vm383, %v885, 0
    %892 = vmatpush.msra.mxu0 0.0
    %893 = vmatpush.msra.mxu0 0.0
    %894 = vmatpush.msra.mxu0 0.0
    %895 = vmatpush.msra.mxu0 0.0
    %896 = vmatpush.msra.mxu0 0.0
    %897 = vmatpush.msra.mxu0 0.0
    %898 = vmatpush.msra.mxu0 0.0
    %899 = vmatpush.msra.mxu0 0.0
    %900 = vmatpush.msra.mxu0 0.0
    %901 = vmatpush.msra.mxu0 0.0
    %902 = vmatpush.msra.mxu0 0.0
    %903 = vmatpush.msra.mxu0 0.0
    %904 = vmatpush.msra.mxu0 0.0
    %905 = vmatpush.msra.mxu0 0.0
    %906 = vmatpush.msra.mxu0 0.0
    %907 = vmatpush.msra.mxu0 %v391
    %908 = vmatmul.f32.gmra.mxu0 %v887
    %v909 = vpop.f32.mrf.mxu0
    %v910 = vadd.f32 0.0, %v909
    %911 = vmatmul.f32.gmra.mxu0 %v890
    %v912 = vpop.f32.mrf.mxu0
    %v913 = vadd.f32 0.0, %v912
    %914 = vdwg.mxu0
    %v915 = vmul.f32 %v910, %v456
    %v916 = vmul.f32 %v913, %v458
    %v917 = vadd.f32 %v882, %v915
    %v918 = vadd.f32 %v883, %v916
    %v919 = vmul.f32 %v842, %v849
    %v920 = vmul.f32 %v844, %v850
    %v922 = vsel %vm383, %v919, 0
    %v925 = vsel %vm383, %v920, 0
    %927 = vmatpush.msra.mxu0 0.0
    %928 = vmatpush.msra.mxu0 0.0
    %929 = vmatpush.msra.mxu0 0.0
    %930 = vmatpush.msra.mxu0 0.0
    %931 = vmatpush.msra.mxu0 0.0
    %932 = vmatpush.msra.mxu0 0.0
    %933 = vmatpush.msra.mxu0 0.0
    %934 = vmatpush.msra.mxu0 0.0
    %935 = vmatpush.msra.mxu0 0.0
    %936 = vmatpush.msra.mxu0 0.0
    %937 = vmatpush.msra.mxu0 0.0
    %938 = vmatpush.msra.mxu0 0.0
    %939 = vmatpush.msra.mxu0 0.0
    %940 = vmatpush.msra.mxu0 0.0
    %941 = vmatpush.msra.mxu0 0.0
    %942 = vmatpush.msra.mxu0 %v391
    %943 = vmatmul.f32.gmra.mxu0 %v922
    %v944 = vpop.f32.mrf.mxu0
    %v945 = vadd.f32 0.0, %v944
    %946 = vmatmul.f32.gmra.mxu0 %v925
    %v947 = vpop.f32.mrf.mxu0
    %v948 = vadd.f32 0.0, %v947
    %949 = vdwg.mxu0
    %v950 = vmul.f32 %v945, %v497
    %v951 = vmul.f32 %v948, %v499
    %v952 = vadd.f32 %v917, %v950
    %v953 = vadd.f32 %v918, %v951
    %v954 = vpack.c.bf16 %v505, %v504
    %v955 = vpack.c.bf16 %v729, %v728
    %v956 = vpack.c.bf16 %v953, %v952
    %v957 = vld [vmem:[%s11] sm:$0xf]
    %v958 = vld [vmem:[%s11 + $0x4] sm:$0xf]
    %v959 = vld [vmem:[%s11 + $0x8] sm:$0xf]
    %v960 = vld [vmem:[%s11 + $0xc] sm:$0xf]
    %v961 = vld [vmem:[%s12] sm:$0x1]
    %v963 = vperm.slane %v961, 0
    %v969 = vunpack.c.l.b16 %v957
    %v970 = vunpack.c.l.b16 %v958
    %v971 = vunpack.c.l.b16 %v959
    %v972 = vunpack.c.l.b16 %v960
    %v973 = vpack.c.b16 %v970, %v969
    %v974 = vpack.c.b16 %v972, %v971
    %v978 = vsel %vm191, %v954, 0
    %v981 = vsel %vm191, %v955, 0
    %v984 = vsel %vm191, %v956, 0
    %986 = vmatpush.bf16.msra.mxu0 0
    %987 = vmatpush.bf16.msra.mxu0 0
    %988 = vmatpush.bf16.msra.mxu0 0
    %989 = vmatpush.bf16.msra.mxu0 0
    %990 = vmatpush.bf16.msra.mxu0 0
    %991 = vmatpush.bf16.msra.mxu0 0
    %992 = vmatpush.bf16.msra.mxu0 %v974
    %993 = vmatpush.bf16.msra.mxu0 %v973
    %994 = vmatmul.bf16.gmra.mxu0 %v978
    %v995 = vpop.f32.mrf.mxu0
    %v996 = vadd.f32 %v963, %v995
    %v997 = vpop.f32.mrf.mxu0
    %v998 = vadd.f32 %v963, %v997
    %999 = vmatmul.bf16.gmra.mxu0 %v981
    %v1000 = vpop.f32.mrf.mxu0
    %v1001 = vadd.f32 %v963, %v1000
    %v1002 = vpop.f32.mrf.mxu0
    %v1003 = vadd.f32 %v963, %v1002
    %1004 = vmatmul.bf16.gmra.mxu0 %v984
    %v1005 = vpop.f32.mrf.mxu0
    %v1006 = vadd.f32 %v963, %v1005
    %v1007 = vpop.f32.mrf.mxu0
    %v1008 = vadd.f32 %v963, %v1007
    %1009 = vdwg.mxu0
    %v1010 = vadd.f32 %v117, %v996
    %v1011 = vadd.f32 %v119, %v998
    %v1012 = vadd.f32 %v162, %v1001
    %v1013 = vadd.f32 %v164, %v1003
    %v1014 = vadd.f32 %v166, %v1006
    %v1015 = vadd.f32 %v167, %v1008
    %v1016 = vld [vmem:[%s13] sm:$0x1]
    %v1017 = vld [vmem:[%s14] sm:$0x1]
    %v1018 = vsel %vm191, %v1010, 0.0
    %1019 = vadd.xlane.f32.xlu0 %v1018
    %v1020 = vpop.xlane.xlu0 %1019
    %v1021 = vsel %vm191, %v1011, 0.0
    %1022 = vadd.xlane.f32.xlu0 %v1021
    %v1023 = vpop.xlane.xlu0 %1022
    %v1024 = vsel %vm191, %v1012, 0.0
    %1025 = vadd.xlane.f32.xlu0 %v1024
    %v1026 = vpop.xlane.xlu0 %1025
    %v1027 = vsel %vm191, %v1013, 0.0
    %1028 = vadd.xlane.f32.xlu0 %v1027
    %v1029 = vpop.xlane.xlu0 %1028
    %v1030 = vsel %vm191, %v1014, 0.0
    %1031 = vadd.xlane.f32.xlu0 %v1030
    %v1032 = vpop.xlane.xlu0 %1031
    %v1033 = vsel %vm191, %v1015, 0.0
    %1034 = vadd.xlane.f32.xlu0 %v1033
    %v1035 = vpop.xlane.xlu0 %1034
    %v1036 = vrcp.pop 32.0
    %v1037 = vmul.f32 32.0, %v1036
    %v1038 = vsub.f32 1.0, %v1037
    %v1039 = vmul.f32 %v1036, %v1038
    %v1040 = vadd.f32 %v1036, %v1039
    %vm1041 = vweird.f32 %v1036
    %v1042 = vsel %vm1041, %v1036, %v1040
    %v1043 = vmul.f32 %v1020, %v1042
    %v1044 = vmul.f32 %v1023, %v1042
    %v1045 = vmul.f32 %v1026, %v1042
    %v1046 = vmul.f32 %v1029, %v1042
    %v1047 = vmul.f32 %v1032, %v1042
    %v1048 = vmul.f32 %v1035, %v1042
    %v1049 = vsub.f32 %v1010, %v1043
    %v1050 = vsub.f32 %v1011, %v1044
    %v1051 = vsub.f32 %v1012, %v1045
    %v1052 = vsub.f32 %v1013, %v1046
    %v1053 = vsub.f32 %v1014, %v1047
    %v1054 = vsub.f32 %v1015, %v1048
    %v1055 = vmul.f32 %v1049, %v1049
    %v1056 = vmul.f32 %v1050, %v1050
    %v1057 = vmul.f32 %v1051, %v1051
    %v1058 = vmul.f32 %v1052, %v1052
    %v1059 = vmul.f32 %v1053, %v1053
    %v1060 = vmul.f32 %v1054, %v1054
    %v1061 = vsel %vm191, %v1055, 0.0
    %1062 = vadd.xlane.f32.xlu0 %v1061
    %v1063 = vpop.xlane.xlu0 %1062
    %v1064 = vsel %vm191, %v1056, 0.0
    %1065 = vadd.xlane.f32.xlu0 %v1064
    %v1066 = vpop.xlane.xlu0 %1065
    %v1067 = vsel %vm191, %v1057, 0.0
    %1068 = vadd.xlane.f32.xlu0 %v1067
    %v1069 = vpop.xlane.xlu0 %1068
    %v1070 = vsel %vm191, %v1058, 0.0
    %1071 = vadd.xlane.f32.xlu0 %v1070
    %v1072 = vpop.xlane.xlu0 %1071
    %v1073 = vsel %vm191, %v1059, 0.0
    %1074 = vadd.xlane.f32.xlu0 %v1073
    %v1075 = vpop.xlane.xlu0 %1074
    %v1076 = vsel %vm191, %v1060, 0.0
    %1077 = vadd.xlane.f32.xlu0 %v1076
    %v1078 = vpop.xlane.xlu0 %1077
    %v1079 = vmul.f32 %v1063, %v1042
    %v1080 = vmul.f32 %v1066, %v1042
    %v1081 = vmul.f32 %v1069, %v1042
    %v1082 = vmul.f32 %v1072, %v1042
    %v1083 = vmul.f32 %v1075, %v1042
    %v1084 = vmul.f32 %v1078, %v1042
    %v1085 = vadd.f32 %v1079, 1e-05
    %v1086 = vadd.f32 %v1080, 1e-05
    %v1087 = vadd.f32 %v1081, 1e-05
    %v1088 = vadd.f32 %v1082, 1e-05
    %v1089 = vadd.f32 %v1083, 1e-05
    %v1090 = vadd.f32 %v1084, 1e-05
    %v1091 = vrsqrt.pop %v1085
    %v1092 = vmul.f32 %v1091, %v1085
    %v1093 = vmul.f32 %v1092, %v1091
    %v1094 = vmul.f32 0.5, %v1093
    %v1095 = vsub.f32 1.5, %v1094
    %v1096 = vmul.f32 %v1091, %v1095
    %vm1097 = vweird.f32 %v1085
    %vm1098 = vweird.f32 %v1091
    %vm1099 = vmor %vm1097, %vm1098
    %v1100 = vsel %vm1099, %v1091, %v1096
    %v1101 = vrsqrt.pop %v1086
    %v1102 = vmul.f32 %v1101, %v1086
    %v1103 = vmul.f32 %v1102, %v1101
    %v1104 = vmul.f32 0.5, %v1103
    %v1105 = vsub.f32 1.5, %v1104
    %v1106 = vmul.f32 %v1101, %v1105
    %vm1107 = vweird.f32 %v1086
    %vm1108 = vweird.f32 %v1101
    %vm1109 = vmor %vm1107, %vm1108
    %v1110 = vsel %vm1109, %v1101, %v1106
    %v1111 = vrsqrt.pop %v1087
    %v1112 = vmul.f32 %v1111, %v1087
    %v1113 = vmul.f32 %v1112, %v1111
    %v1114 = vmul.f32 0.5, %v1113
    %v1115 = vsub.f32 1.5, %v1114
    %v1116 = vmul.f32 %v1111, %v1115
    %vm1117 = vweird.f32 %v1087
    %vm1118 = vweird.f32 %v1111
    %vm1119 = vmor %vm1117, %vm1118
    %v1120 = vsel %vm1119, %v1111, %v1116
    %v1121 = vrsqrt.pop %v1088
    %v1122 = vmul.f32 %v1121, %v1088
    %v1123 = vmul.f32 %v1122, %v1121
    %v1124 = vmul.f32 0.5, %v1123
    %v1125 = vsub.f32 1.5, %v1124
    %v1126 = vmul.f32 %v1121, %v1125
    %vm1127 = vweird.f32 %v1088
    %vm1128 = vweird.f32 %v1121
    %vm1129 = vmor %vm1127, %vm1128
    %v1130 = vsel %vm1129, %v1121, %v1126
    %v1131 = vrsqrt.pop %v1089
    %v1132 = vmul.f32 %v1131, %v1089
    %v1133 = vmul.f32 %v1132, %v1131
    %v1134 = vmul.f32 0.5, %v1133
    %v1135 = vsub.f32 1.5, %v1134
    %v1136 = vmul.f32 %v1131, %v1135
    %vm1137 = vweird.f32 %v1089
    %vm1138 = vweird.f32 %v1131
    %vm1139 = vmor %vm1137, %vm1138
    %v1140 = vsel %vm1139, %v1131, %v1136
    %v1141 = vrsqrt.pop %v1090
    %v1142 = vmul.f32 %v1141, %v1090
    %v1143 = vmul.f32 %v1142, %v1141
    %v1144 = vmul.f32 0.5, %v1143
    %v1145 = vsub.f32 1.5, %v1144
    %v1146 = vmul.f32 %v1141, %v1145
    %vm1147 = vweird.f32 %v1090
    %vm1148 = vweird.f32 %v1141
    %vm1149 = vmor %vm1147, %vm1148
    %v1150 = vsel %vm1149, %v1141, %v1146
    %v1151 = vmul.f32 %v1049, %v1100
    %v1152 = vmul.f32 %v1050, %v1110
    %v1153 = vmul.f32 %v1051, %v1120
    %v1154 = vmul.f32 %v1052, %v1130
    %v1155 = vmul.f32 %v1053, %v1140
    %v1156 = vmul.f32 %v1054, %v1150
    %v1158 = vperm.slane %v1016, 0
    %v1160 = vmul.f32 %v1151, %v1158
    %v1161 = vmul.f32 %v1152, %v1158
    %v1162 = vmul.f32 %v1153, %v1158
    %v1163 = vmul.f32 %v1154, %v1158
    %v1164 = vmul.f32 %v1155, %v1158
    %v1165 = vmul.f32 %v1156, %v1158
    %v1167 = vperm.slane %v1017, 0
    %v1169 = vadd.f32 %v1160, %v1167
    %v1170 = vadd.f32 %v1161, %v1167
    %v1171 = vadd.f32 %v1162, %v1167
    %v1172 = vadd.f32 %v1163, %v1167
    %v1173 = vadd.f32 %v1164, %v1167
    %v1174 = vadd.f32 %v1165, %v1167
    %v1175 = vpack.c.bf16 %v1170, %v1169
    %v1176 = vpack.c.bf16 %v1172, %v1171
    %v1177 = vpack.c.bf16 %v1174, %v1173
    %v1178 = vld [vmem:[%s15] sm:$0xf]
    %v1179 = vld [vmem:[%s15 + $0x4] sm:$0xf]
    %v1180 = vld [vmem:[%s15 + $0x8] sm:$0xf]
    %v1181 = vld [vmem:[%s15 + $0xc] sm:$0xf]
    %v1182 = vld [vmem:[%s16] sm:$0x1]
    %v1184 = vperm.slane %v1182, 0
    %v1190 = vunpack.c.l.b16 %v1178
    %v1191 = vunpack.c.l.b16 %v1179
    %v1192 = vunpack.c.l.b16 %v1180
    %v1193 = vunpack.c.l.b16 %v1181
    %v1194 = vpack.c.b16 %v1191, %v1190
    %v1195 = vpack.c.b16 %v1193, %v1192
    %v1199 = vsel %vm191, %v1175, 0
    %v1202 = vsel %vm191, %v1176, 0
    %v1205 = vsel %vm191, %v1177, 0
    %1207 = vmatpush.bf16.msra.mxu0 0
    %1208 = vmatpush.bf16.msra.mxu0 0
    %1209 = vmatpush.bf16.msra.mxu0 0
    %1210 = vmatpush.bf16.msra.mxu0 0
    %1211 = vmatpush.bf16.msra.mxu0 0
    %1212 = vmatpush.bf16.msra.mxu0 0
    %1213 = vmatpush.bf16.msra.mxu0 %v1195
    %1214 = vmatpush.bf16.msra.mxu0 %v1194
    %1215 = vmatmul.bf16.gmra.mxu0 %v1199
    %v1216 = vpop.f32.mrf.mxu0
    %v1217 = vadd.f32 %v1184, %v1216
    %v1218 = vpop.f32.mrf.mxu0
    %v1219 = vadd.f32 %v1184, %v1218
    %1220 = vmatmul.bf16.gmra.mxu0 %v1202
    %v1221 = vpop.f32.mrf.mxu0
    %v1222 = vadd.f32 %v1184, %v1221
    %v1223 = vpop.f32.mrf.mxu0
    %v1224 = vadd.f32 %v1184, %v1223
    %1225 = vmatmul.bf16.gmra.mxu0 %v1205
    %v1226 = vpop.f32.mrf.mxu0
    %v1227 = vadd.f32 %v1184, %v1226
    %v1228 = vpop.f32.mrf.mxu0
    %v1229 = vadd.f32 %v1184, %v1228
    %1230 = vdwg.mxu0
    %v1231 = vmul.f32 %v1217, 0.5
    %v1232 = vmul.f32 %v1219, 0.5
    %v1233 = vmul.f32 %v1222, 0.5
    %v1234 = vmul.f32 %v1224, 0.5
    %v1235 = vmul.f32 %v1227, 0.5
    %v1236 = vmul.f32 %v1229, 0.5
    %v1237 = vmul.f32 %v1217, 0.70710677
    %v1238 = vmul.f32 %v1219, 0.70710677
    %v1239 = vmul.f32 %v1222, 0.70710677
    %v1240 = vmul.f32 %v1224, 0.70710677
    %v1241 = vmul.f32 %v1227, 0.70710677
    %v1242 = vmul.f32 %v1229, 0.70710677
    %v1243 = vmul.f32 %v1237, %v1237
    %v1244 = vmin.f32 16.0, %v1243
    %v1245 = vmul.f32 %v1244, 2.1237322e-06
    %v1246 = vadd.f32 %v1245, 0.00028619796
    %v1247 = vmul.f32 %v1244, %v1246
    %v1248 = vadd.f32 %v1247, 0.0036580483
    %v1249 = vmul.f32 %v1244, %v1248
    %v1250 = vadd.f32 %v1249, 0.05243302
    %v1251 = vmul.f32 %v1244, %v1250
    %v1252 = vadd.f32 %v1251, 0.18741608
    %v1253 = vmul.f32 %v1244, %v1252
    %v1254 = vadd.f32 %v1253, 1.1283791
    %v1255 = vmul.f32 %v1237, %v1254
    %v1256 = vmul.f32 %v1244, 3.8918573e-05
    %v1257 = vadd.f32 %v1256, 0.001143296
    %v1258 = vmul.f32 %v1244, %v1257
    %v1259 = vadd.f32 %v1258, 0.014752088
    %v1260 = vmul.f32 %v1244, %v1259
    %v1261 = vadd.f32 %v1260, 0.112945676
    %v1262 = vmul.f32 %v1244, %v1261
    %v1263 = vadd.f32 %v1262, 0.4994258
    %v1264 = vmul.f32 %v1244, %v1263
    %v1265 = vadd.f32 %v1264, 1.0
    %v1266 = vrcp.pop %v1265
    %v1267 = vmul.f32 %v1265, %v1266
    %v1268 = vsub.f32 1.0, %v1267
    %v1269 = vmul.f32 %v1266, %v1268
    %v1270 = vadd.f32 %v1266, %v1269
    %vm1271 = vweird.f32 %v1265
    %vm1272 = vweird.f32 %v1266
    %vm1273 = vmor %vm1271, %vm1272
    %v1274 = vsel %vm1273, %v1266, %v1270
    %v1275 = vand.u32 2147483647, %v1265
    %vm1276 = vcmp.eq.f32.partialorder %v1275, 8.507059e+37
    %v1277 = vand.u32 %v1265, 2147483648
    %v1278 = vor.u32 1.1754944e-38, %v1277
    %v1279 = vsel %vm1276, %v1278, %v1274
    %v1280 = vmul.f32 %v1255, %v1279
    %v1281 = vmin.f32 %v1280, 1.0
    %v1282 = vmax.f32 %v1281, -1.0
    %v1283 = vmul.f32 %v1238, %v1238
    %v1284 = vmin.f32 16.0, %v1283
    %v1285 = vmul.f32 %v1284, 2.1237322e-06
    %v1286 = vadd.f32 %v1285, 0.00028619796
    %v1287 = vmul.f32 %v1284, %v1286
    %v1288 = vadd.f32 %v1287, 0.0036580483
    %v1289 = vmul.f32 %v1284, %v1288
    %v1290 = vadd.f32 %v1289, 0.05243302
    %v1291 = vmul.f32 %v1284, %v1290
    %v1292 = vadd.f32 %v1291, 0.18741608
    %v1293 = vmul.f32 %v1284, %v1292
    %v1294 = vadd.f32 %v1293, 1.1283791
    %v1295 = vmul.f32 %v1238, %v1294
    %v1296 = vmul.f32 %v1284, 3.8918573e-05
    %v1297 = vadd.f32 %v1296, 0.001143296
    %v1298 = vmul.f32 %v1284, %v1297
    %v1299 = vadd.f32 %v1298, 0.014752088
    %v1300 = vmul.f32 %v1284, %v1299
    %v1301 = vadd.f32 %v1300, 0.112945676
    %v1302 = vmul.f32 %v1284, %v1301
    %v1303 = vadd.f32 %v1302, 0.4994258
    %v1304 = vmul.f32 %v1284, %v1303
    %v1305 = vadd.f32 %v1304, 1.0
    %v1306 = vrcp.pop %v1305
    %v1307 = vmul.f32 %v1305, %v1306
    %v1308 = vsub.f32 1.0, %v1307
    %v1309 = vmul.f32 %v1306, %v1308
    %v1310 = vadd.f32 %v1306, %v1309
    %vm1311 = vweird.f32 %v1305
    %vm1312 = vweird.f32 %v1306
    %vm1313 = vmor %vm1311, %vm1312
    %v1314 = vsel %vm1313, %v1306, %v1310
    %v1315 = vand.u32 2147483647, %v1305
    %vm1316 = vcmp.eq.f32.partialorder %v1315, 8.507059e+37
    %v1317 = vand.u32 %v1305, 2147483648
    %v1318 = vor.u32 1.1754944e-38, %v1317
    %v1319 = vsel %vm1316, %v1318, %v1314
    %v1320 = vmul.f32 %v1295, %v1319
    %v1321 = vmin.f32 %v1320, 1.0
    %v1322 = vmax.f32 %v1321, -1.0
    %v1323 = vmul.f32 %v1239, %v1239
    %v1324 = vmin.f32 16.0, %v1323
    %v1325 = vmul.f32 %v1324, 2.1237322e-06
    %v1326 = vadd.f32 %v1325, 0.00028619796
    %v1327 = vmul.f32 %v1324, %v1326
    %v1328 = vadd.f32 %v1327, 0.0036580483
    %v1329 = vmul.f32 %v1324, %v1328
    %v1330 = vadd.f32 %v1329, 0.05243302
    %v1331 = vmul.f32 %v1324, %v1330
    %v1332 = vadd.f32 %v1331, 0.18741608
    %v1333 = vmul.f32 %v1324, %v1332
    %v1334 = vadd.f32 %v1333, 1.1283791
    %v1335 = vmul.f32 %v1239, %v1334
    %v1336 = vmul.f32 %v1324, 3.8918573e-05
    %v1337 = vadd.f32 %v1336, 0.001143296
    %v1338 = vmul.f32 %v1324, %v1337
    %v1339 = vadd.f32 %v1338, 0.014752088
    %v1340 = vmul.f32 %v1324, %v1339
    %v1341 = vadd.f32 %v1340, 0.112945676
    %v1342 = vmul.f32 %v1324, %v1341
    %v1343 = vadd.f32 %v1342, 0.4994258
    %v1344 = vmul.f32 %v1324, %v1343
    %v1345 = vadd.f32 %v1344, 1.0
    %v1346 = vrcp.pop %v1345
    %v1347 = vmul.f32 %v1345, %v1346
    %v1348 = vsub.f32 1.0, %v1347
    %v1349 = vmul.f32 %v1346, %v1348
    %v1350 = vadd.f32 %v1346, %v1349
    %vm1351 = vweird.f32 %v1345
    %vm1352 = vweird.f32 %v1346
    %vm1353 = vmor %vm1351, %vm1352
    %v1354 = vsel %vm1353, %v1346, %v1350
    %v1355 = vand.u32 2147483647, %v1345
    %vm1356 = vcmp.eq.f32.partialorder %v1355, 8.507059e+37
    %v1357 = vand.u32 %v1345, 2147483648
    %v1358 = vor.u32 1.1754944e-38, %v1357
    %v1359 = vsel %vm1356, %v1358, %v1354
    %v1360 = vmul.f32 %v1335, %v1359
    %v1361 = vmin.f32 %v1360, 1.0
    %v1362 = vmax.f32 %v1361, -1.0
    %v1363 = vmul.f32 %v1240, %v1240
    %v1364 = vmin.f32 16.0, %v1363
    %v1365 = vmul.f32 %v1364, 2.1237322e-06
    %v1366 = vadd.f32 %v1365, 0.00028619796
    %v1367 = vmul.f32 %v1364, %v1366
    %v1368 = vadd.f32 %v1367, 0.0036580483
    %v1369 = vmul.f32 %v1364, %v1368
    %v1370 = vadd.f32 %v1369, 0.05243302
    %v1371 = vmul.f32 %v1364, %v1370
    %v1372 = vadd.f32 %v1371, 0.18741608
    %v1373 = vmul.f32 %v1364, %v1372
    %v1374 = vadd.f32 %v1373, 1.1283791
    %v1375 = vmul.f32 %v1240, %v1374
    %v1376 = vmul.f32 %v1364, 3.8918573e-05
    %v1377 = vadd.f32 %v1376, 0.001143296
    %v1378 = vmul.f32 %v1364, %v1377
    %v1379 = vadd.f32 %v1378, 0.014752088
    %v1380 = vmul.f32 %v1364, %v1379
    %v1381 = vadd.f32 %v1380, 0.112945676
    %v1382 = vmul.f32 %v1364, %v1381
    %v1383 = vadd.f32 %v1382, 0.4994258
    %v1384 = vmul.f32 %v1364, %v1383
    %v1385 = vadd.f32 %v1384, 1.0
    %v1386 = vrcp.pop %v1385
    %v1387 = vmul.f32 %v1385, %v1386
    %v1388 = vsub.f32 1.0, %v1387
    %v1389 = vmul.f32 %v1386, %v1388
    %v1390 = vadd.f32 %v1386, %v1389
    %vm1391 = vweird.f32 %v1385
    %vm1392 = vweird.f32 %v1386
    %vm1393 = vmor %vm1391, %vm1392
    %v1394 = vsel %vm1393, %v1386, %v1390
    %v1395 = vand.u32 2147483647, %v1385
    %vm1396 = vcmp.eq.f32.partialorder %v1395, 8.507059e+37
    %v1397 = vand.u32 %v1385, 2147483648
    %v1398 = vor.u32 1.1754944e-38, %v1397
    %v1399 = vsel %vm1396, %v1398, %v1394
    %v1400 = vmul.f32 %v1375, %v1399
    %v1401 = vmin.f32 %v1400, 1.0
    %v1402 = vmax.f32 %v1401, -1.0
    %v1403 = vmul.f32 %v1241, %v1241
    %v1404 = vmin.f32 16.0, %v1403
    %v1405 = vmul.f32 %v1404, 2.1237322e-06
    %v1406 = vadd.f32 %v1405, 0.00028619796
    %v1407 = vmul.f32 %v1404, %v1406
    %v1408 = vadd.f32 %v1407, 0.0036580483
    %v1409 = vmul.f32 %v1404, %v1408
    %v1410 = vadd.f32 %v1409, 0.05243302
    %v1411 = vmul.f32 %v1404, %v1410
    %v1412 = vadd.f32 %v1411, 0.18741608
    %v1413 = vmul.f32 %v1404, %v1412
    %v1414 = vadd.f32 %v1413, 1.1283791
    %v1415 = vmul.f32 %v1241, %v1414
    %v1416 = vmul.f32 %v1404, 3.8918573e-05
    %v1417 = vadd.f32 %v1416, 0.001143296
    %v1418 = vmul.f32 %v1404, %v1417
    %v1419 = vadd.f32 %v1418, 0.014752088
    %v1420 = vmul.f32 %v1404, %v1419
    %v1421 = vadd.f32 %v1420, 0.112945676
    %v1422 = vmul.f32 %v1404, %v1421
    %v1423 = vadd.f32 %v1422, 0.4994258
    %v1424 = vmul.f32 %v1404, %v1423
    %v1425 = vadd.f32 %v1424, 1.0
    %v1426 = vrcp.pop %v1425
    %v1427 = vmul.f32 %v1425, %v1426
    %v1428 = vsub.f32 1.0, %v1427
    %v1429 = vmul.f32 %v1426, %v1428
    %v1430 = vadd.f32 %v1426, %v1429
    %vm1431 = vweird.f32 %v1425
    %vm1432 = vweird.f32 %v1426
    %vm1433 = vmor %vm1431, %vm1432
    %v1434 = vsel %vm1433, %v1426, %v1430
    %v1435 = vand.u32 2147483647, %v1425
    %vm1436 = vcmp.eq.f32.partialorder %v1435, 8.507059e+37
    %v1437 = vand.u32 %v1425, 2147483648
    %v1438 = vor.u32 1.1754944e-38, %v1437
    %v1439 = vsel %vm1436, %v1438, %v1434
    %v1440 = vmul.f32 %v1415, %v1439
    %v1441 = vmin.f32 %v1440, 1.0
    %v1442 = vmax.f32 %v1441, -1.0
    %v1443 = vmul.f32 %v1242, %v1242
    %v1444 = vmin.f32 16.0, %v1443
    %v1445 = vmul.f32 %v1444, 2.1237322e-06
    %v1446 = vadd.f32 %v1445, 0.00028619796
    %v1447 = vmul.f32 %v1444, %v1446
    %v1448 = vadd.f32 %v1447, 0.0036580483
    %v1449 = vmul.f32 %v1444, %v1448
    %v1450 = vadd.f32 %v1449, 0.05243302
    %v1451 = vmul.f32 %v1444, %v1450
    %v1452 = vadd.f32 %v1451, 0.18741608
    %v1453 = vmul.f32 %v1444, %v1452
    %v1454 = vadd.f32 %v1453, 1.1283791
    %v1455 = vmul.f32 %v1242, %v1454
    %v1456 = vmul.f32 %v1444, 3.8918573e-05
    %v1457 = vadd.f32 %v1456, 0.001143296
    %v1458 = vmul.f32 %v1444, %v1457
    %v1459 = vadd.f32 %v1458, 0.014752088
    %v1460 = vmul.f32 %v1444, %v1459
    %v1461 = vadd.f32 %v1460, 0.112945676
    %v1462 = vmul.f32 %v1444, %v1461
    %v1463 = vadd.f32 %v1462, 0.4994258
    %v1464 = vmul.f32 %v1444, %v1463
    %v1465 = vadd.f32 %v1464, 1.0
    %v1466 = vrcp.pop %v1465
    %v1467 = vmul.f32 %v1465, %v1466
    %v1468 = vsub.f32 1.0, %v1467
    %v1469 = vmul.f32 %v1466, %v1468
    %v1470 = vadd.f32 %v1466, %v1469
    %vm1471 = vweird.f32 %v1465
    %vm1472 = vweird.f32 %v1466
    %vm1473 = vmor %vm1471, %vm1472
    %v1474 = vsel %vm1473, %v1466, %v1470
    %v1475 = vand.u32 2147483647, %v1465
    %vm1476 = vcmp.eq.f32.partialorder %v1475, 8.507059e+37
    %v1477 = vand.u32 %v1465, 2147483648
    %v1478 = vor.u32 1.1754944e-38, %v1477
    %v1479 = vsel %vm1476, %v1478, %v1474
    %v1480 = vmul.f32 %v1455, %v1479
    %v1481 = vmin.f32 %v1480, 1.0
    %v1482 = vmax.f32 %v1481, -1.0
    %v1483 = vadd.f32 %v1282, 1.0
    %v1484 = vadd.f32 %v1322, 1.0
    %v1485 = vadd.f32 %v1362, 1.0
    %v1486 = vadd.f32 %v1402, 1.0
    %v1487 = vadd.f32 %v1442, 1.0
    %v1488 = vadd.f32 %v1482, 1.0
    %v1489 = vmul.f32 %v1231, %v1483
    %v1490 = vmul.f32 %v1232, %v1484
    %v1491 = vmul.f32 %v1233, %v1485
    %v1492 = vmul.f32 %v1234, %v1486
    %v1493 = vmul.f32 %v1235, %v1487
    %v1494 = vmul.f32 %v1236, %v1488
    %v1495 = vpack.c.bf16 %v1490, %v1489
    %v1496 = vpack.c.bf16 %v1492, %v1491
    %v1497 = vpack.c.bf16 %v1494, %v1493
    %v1498 = vld [vmem:[%s17] sm:$0xf]
    %v1499 = vld [vmem:[%s17 + $0x4] sm:$0xf]
    %v1500 = vld [vmem:[%s17 + $0x8] sm:$0xf]
    %v1501 = vld [vmem:[%s17 + $0xc] sm:$0xf]
    %v1502 = vld [vmem:[%s17 + $0x10] sm:$0xf]
    %v1503 = vld [vmem:[%s17 + $0x14] sm:$0xf]
    %v1504 = vld [vmem:[%s17 + $0x18] sm:$0xf]
    %v1505 = vld [vmem:[%s17 + $0x1c] sm:$0xf]
    %v1506 = vld [vmem:[%s17 + $0x20] sm:$0xf]
    %v1507 = vld [vmem:[%s17 + $0x24] sm:$0xf]
    %v1508 = vld [vmem:[%s17 + $0x28] sm:$0xf]
    %v1509 = vld [vmem:[%s17 + $0x2c] sm:$0xf]
    %v1510 = vld [vmem:[%s17 + $0x30] sm:$0xf]
    %v1511 = vld [vmem:[%s17 + $0x34] sm:$0xf]
    %v1512 = vld [vmem:[%s17 + $0x38] sm:$0xf]
    %v1513 = vld [vmem:[%s17 + $0x3c] sm:$0xf]
    %v1514 = vld [vmem:[%s18] sm:$0x1]
    %v1516 = vperm.slane %v1514, 0
    %v1534 = vunpack.c.l.b16 %v1498
    %v1535 = vunpack.c.l.b16 %v1499
    %v1536 = vunpack.c.l.b16 %v1500
    %v1537 = vunpack.c.l.b16 %v1501
    %v1538 = vunpack.c.l.b16 %v1502
    %v1539 = vunpack.c.l.b16 %v1503
    %v1540 = vunpack.c.l.b16 %v1504
    %v1541 = vunpack.c.l.b16 %v1505
    %v1542 = vunpack.c.l.b16 %v1506
    %v1543 = vunpack.c.l.b16 %v1507
    %v1544 = vunpack.c.l.b16 %v1508
    %v1545 = vunpack.c.l.b16 %v1509
    %v1546 = vunpack.c.l.b16 %v1510
    %v1547 = vunpack.c.l.b16 %v1511
    %v1548 = vunpack.c.l.b16 %v1512
    %v1549 = vunpack.c.l.b16 %v1513
    %v1550 = vpack.c.b16 %v1535, %v1534
    %v1551 = vpack.c.b16 %v1537, %v1536
    %v1552 = vpack.c.b16 %v1539, %v1538
    %v1553 = vpack.c.b16 %v1541, %v1540
    %v1554 = vpack.c.b16 %v1543, %v1542
    %v1555 = vpack.c.b16 %v1545, %v1544
    %v1556 = vpack.c.b16 %v1547, %v1546
    %v1557 = vpack.c.b16 %v1549, %v1548
    %1566 = vmatpush.bf16.msra.mxu0 %v1557
    %1567 = vmatpush.bf16.msra.mxu0 %v1556
    %1568 = vmatpush.bf16.msra.mxu0 %v1555
    %1569 = vmatpush.bf16.msra.mxu0 %v1554
    %1570 = vmatpush.bf16.msra.mxu0 %v1553
    %1571 = vmatpush.bf16.msra.mxu0 %v1552
    %1572 = vmatpush.bf16.msra.mxu0 %v1551
    %1573 = vmatpush.bf16.msra.mxu0 %v1550
    %1574 = vmatmul.bf16.gmra.mxu0 %v1495
    %v1575 = vpop.f32.mrf.mxu0
    %v1576 = vadd.f32 %v1516, %v1575
    %v1577 = vpop.f32.mrf.mxu0
    %v1578 = vadd.f32 %v1516, %v1577
    %1579 = vmatmul.bf16.gmra.mxu0 %v1496
    %v1580 = vpop.f32.mrf.mxu0
    %v1581 = vadd.f32 %v1516, %v1580
    %v1582 = vpop.f32.mrf.mxu0
    %v1583 = vadd.f32 %v1516, %v1582
    %1584 = vmatmul.bf16.gmra.mxu0 %v1497
    %v1585 = vpop.f32.mrf.mxu0
    %v1586 = vadd.f32 %v1516, %v1585
    %v1587 = vpop.f32.mrf.mxu0
    %v1588 = vadd.f32 %v1516, %v1587
    %1589 = vdwg.mxu0
    %v1590 = vadd.f32 %v1169, %v1576
    %v1591 = vadd.f32 %v1170, %v1578
    %v1592 = vadd.f32 %v1171, %v1581
    %v1593 = vadd.f32 %v1172, %v1583
    %v1594 = vadd.f32 %v1173, %v1586
    %v1595 = vadd.f32 %v1174, %v1588
    %v1596 = vld [vmem:[%s19] sm:$0x1]
    %v1597 = vld [vmem:[%s20] sm:$0x1]
    %v1598 = vsel %vm191, %v1590, 0.0
    %1599 = vadd.xlane.f32.xlu0 %v1598
    %v1600 = vpop.xlane.xlu0 %1599
    %v1601 = vsel %vm191, %v1591, 0.0
    %1602 = vadd.xlane.f32.xlu0 %v1601
    %v1603 = vpop.xlane.xlu0 %1602
    %v1604 = vsel %vm191, %v1592, 0.0
    %1605 = vadd.xlane.f32.xlu0 %v1604
    %v1606 = vpop.xlane.xlu0 %1605
    %v1607 = vsel %vm191, %v1593, 0.0
    %1608 = vadd.xlane.f32.xlu0 %v1607
    %v1609 = vpop.xlane.xlu0 %1608
    %v1610 = vsel %vm191, %v1594, 0.0
    %1611 = vadd.xlane.f32.xlu0 %v1610
    %v1612 = vpop.xlane.xlu0 %1611
    %v1613 = vsel %vm191, %v1595, 0.0
    %1614 = vadd.xlane.f32.xlu0 %v1613
    %v1615 = vpop.xlane.xlu0 %1614
    %v1616 = vmul.f32 %v1600, %v1042
    %v1617 = vmul.f32 %v1603, %v1042
    %v1618 = vmul.f32 %v1606, %v1042
    %v1619 = vmul.f32 %v1609, %v1042
    %v1620 = vmul.f32 %v1612, %v1042
    %v1621 = vmul.f32 %v1615, %v1042
    %v1622 = vsub.f32 %v1590, %v1616
    %v1623 = vsub.f32 %v1591, %v1617
    %v1624 = vsub.f32 %v1592, %v1618
    %v1625 = vsub.f32 %v1593, %v1619
    %v1626 = vsub.f32 %v1594, %v1620
    %v1627 = vsub.f32 %v1595, %v1621
    %v1628 = vmul.f32 %v1622, %v1622
    %v1629 = vmul.f32 %v1623, %v1623
    %v1630 = vmul.f32 %v1624, %v1624
    %v1631 = vmul.f32 %v1625, %v1625
    %v1632 = vmul.f32 %v1626, %v1626
    %v1633 = vmul.f32 %v1627, %v1627
    %v1634 = vsel %vm191, %v1628, 0.0
    %1635 = vadd.xlane.f32.xlu0 %v1634
    %v1636 = vpop.xlane.xlu0 %1635
    %v1637 = vsel %vm191, %v1629, 0.0
    %1638 = vadd.xlane.f32.xlu0 %v1637
    %v1639 = vpop.xlane.xlu0 %1638
    %v1640 = vsel %vm191, %v1630, 0.0
    %1641 = vadd.xlane.f32.xlu0 %v1640
    %v1642 = vpop.xlane.xlu0 %1641
    %v1643 = vsel %vm191, %v1631, 0.0
    %1644 = vadd.xlane.f32.xlu0 %v1643
    %v1645 = vpop.xlane.xlu0 %1644
    %v1646 = vsel %vm191, %v1632, 0.0
    %1647 = vadd.xlane.f32.xlu0 %v1646
    %v1648 = vpop.xlane.xlu0 %1647
    %v1649 = vsel %vm191, %v1633, 0.0
    %1650 = vadd.xlane.f32.xlu0 %v1649
    %v1651 = vpop.xlane.xlu0 %1650
    %v1652 = vmul.f32 %v1636, %v1042
    %v1653 = vmul.f32 %v1639, %v1042
    %v1654 = vmul.f32 %v1642, %v1042
    %v1655 = vmul.f32 %v1645, %v1042
    %v1656 = vmul.f32 %v1648, %v1042
    %v1657 = vmul.f32 %v1651, %v1042
    %v1658 = vadd.f32 %v1652, 1e-05
    %v1659 = vadd.f32 %v1653, 1e-05
    %v1660 = vadd.f32 %v1654, 1e-05
    %v1661 = vadd.f32 %v1655, 1e-05
    %v1662 = vadd.f32 %v1656, 1e-05
    %v1663 = vadd.f32 %v1657, 1e-05
    %v1664 = vrsqrt.pop %v1658
    %v1665 = vmul.f32 %v1664, %v1658
    %v1666 = vmul.f32 %v1665, %v1664
    %v1667 = vmul.f32 0.5, %v1666
    %v1668 = vsub.f32 1.5, %v1667
    %v1669 = vmul.f32 %v1664, %v1668
    %vm1670 = vweird.f32 %v1658
    %vm1671 = vweird.f32 %v1664
    %vm1672 = vmor %vm1670, %vm1671
    %v1673 = vsel %vm1672, %v1664, %v1669
    %v1674 = vrsqrt.pop %v1659
    %v1675 = vmul.f32 %v1674, %v1659
    %v1676 = vmul.f32 %v1675, %v1674
    %v1677 = vmul.f32 0.5, %v1676
    %v1678 = vsub.f32 1.5, %v1677
    %v1679 = vmul.f32 %v1674, %v1678
    %vm1680 = vweird.f32 %v1659
    %vm1681 = vweird.f32 %v1674
    %vm1682 = vmor %vm1680, %vm1681
    %v1683 = vsel %vm1682, %v1674, %v1679
    %v1684 = vrsqrt.pop %v1660
    %v1685 = vmul.f32 %v1684, %v1660
    %v1686 = vmul.f32 %v1685, %v1684
    %v1687 = vmul.f32 0.5, %v1686
    %v1688 = vsub.f32 1.5, %v1687
    %v1689 = vmul.f32 %v1684, %v1688
    %vm1690 = vweird.f32 %v1660
    %vm1691 = vweird.f32 %v1684
    %vm1692 = vmor %vm1690, %vm1691
    %v1693 = vsel %vm1692, %v1684, %v1689
    %v1694 = vrsqrt.pop %v1661
    %v1695 = vmul.f32 %v1694, %v1661
    %v1696 = vmul.f32 %v1695, %v1694
    %v1697 = vmul.f32 0.5, %v1696
    %v1698 = vsub.f32 1.5, %v1697
    %v1699 = vmul.f32 %v1694, %v1698
    %vm1700 = vweird.f32 %v1661
    %vm1701 = vweird.f32 %v1694
    %vm1702 = vmor %vm1700, %vm1701
    %v1703 = vsel %vm1702, %v1694, %v1699
    %v1704 = vrsqrt.pop %v1662
    %v1705 = vmul.f32 %v1704, %v1662
    %v1706 = vmul.f32 %v1705, %v1704
    %v1707 = vmul.f32 0.5, %v1706
    %v1708 = vsub.f32 1.5, %v1707
    %v1709 = vmul.f32 %v1704, %v1708
    %vm1710 = vweird.f32 %v1662
    %vm1711 = vweird.f32 %v1704
    %vm1712 = vmor %vm1710, %vm1711
    %v1713 = vsel %vm1712, %v1704, %v1709
    %v1714 = vrsqrt.pop %v1663
    %v1715 = vmul.f32 %v1714, %v1663
    %v1716 = vmul.f32 %v1715, %v1714
    %v1717 = vmul.f32 0.5, %v1716
    %v1718 = vsub.f32 1.5, %v1717
    %v1719 = vmul.f32 %v1714, %v1718
    %vm1720 = vweird.f32 %v1663
    %vm1721 = vweird.f32 %v1714
    %vm1722 = vmor %vm1720, %vm1721
    %v1723 = vsel %vm1722, %v1714, %v1719
    %v1724 = vmul.f32 %v1622, %v1673
    %v1725 = vmul.f32 %v1623, %v1683
    %v1726 = vmul.f32 %v1624, %v1693
    %v1727 = vmul.f32 %v1625, %v1703
    %v1728 = vmul.f32 %v1626, %v1713
    %v1729 = vmul.f32 %v1627, %v1723
    %v1731 = vperm.slane %v1596, 0
    %v1733 = vmul.f32 %v1724, %v1731
    %v1734 = vmul.f32 %v1725, %v1731
    %v1735 = vmul.f32 %v1726, %v1731
    %v1736 = vmul.f32 %v1727, %v1731
    %v1737 = vmul.f32 %v1728, %v1731
    %v1738 = vmul.f32 %v1729, %v1731
    %v1740 = vperm.slane %v1597, 0
    %v1742 = vadd.f32 %v1733, %v1740
    %v1743 = vadd.f32 %v1734, %v1740
    %v1744 = vadd.f32 %v1735, %v1740
    %v1745 = vadd.f32 %v1736, %v1740
    %v1746 = vadd.f32 %v1737, %v1740
    %v1747 = vadd.f32 %v1738, %v1740
    %1748 = vst.msk [vmem:[#allocation5] sm:$0xff] %vm191, %v1742
    %1749 = vst.msk [vmem:[#allocation5 + $0x8] sm:$0xff] %vm191, %v1743
    %1752 = vrot.lane.b32.xlu0 %v1744, 32
    %v1753 = vpop.permute.xlu0 %1752
    %1754 = vrot.lane.b32.xlu0 %v1745, 32
    %v1755 = vpop.permute.xlu0 %1754
    %vm1758 = vcmask 523520
    %1759 = vst.msk [vmem:[#allocation5] sm:$0xff] %vm1758, %v1753
    %1760 = vst.msk [vmem:[#allocation5 + $0x8] sm:$0xff] %vm1758, %v1755
    %1763 = vrot.lane.b32.xlu0 %v1746, 64
    %v1764 = vpop.permute.xlu0 %1763
    %1765 = vrot.lane.b32.xlu0 %v1747, 64
    %v1766 = vpop.permute.xlu0 %1765
    %vm1769 = vcmask 785920
    %1770 = vst.msk [vmem:[#allocation5] sm:$0xff] %vm1769, %v1764
    %1771 = vst.msk [vmem:[#allocation5 + $0x8] sm:$0xff] %vm1769, %v1766
    // Predicated region
    $region90: #{tpu_custom_call.1} parent=1 // pred_check
      _
    $region91: #{tpu_custom_call.1} parent=1 // pred_check_branch
      %1773 = sbr.rel (0) target = $region93
    $region92: #{tpu_custom_call.1} parent=1 // pred_region
      %1775 = vsyncadd [#allocation4], 0
      %s1776 = sshll.u32 [#allocation5], 4
      %s1777 = int_to_ptr.vmem [resolvable:$true] %s1776
      %s1778 = sshll.u32 %s21, 4
      %s1779 = int_to_ptr.hbm [resolvable:$true] %s1778
      %1784 = dma.vmem_to_hbm [thread:$0]  %s1777, 256, %s1779, [#allocation4], 128, 128, 8
    $region93: #{tpu_custom_call.1} parent=1 // pred_fallthru
      _
    // Predicated region
    $region94: #{tpu_custom_call.1} parent=1 // pred_check
      _
    $region95: #{tpu_custom_call.1} parent=1 // pred_check_branch
      %1786 = sbr.rel (0) target = $region97
    $region96: #{tpu_custom_call.1} parent=1 // pred_region
      %1788 = dma.done [#allocation4], 256
    $region97: #{tpu_custom_call.1} parent=1 // pred_fallthru
      _
    %1789 = vsyncpa [#allocation3], 1
    %1790 = vsyncpa [#allocation4], 1

</llo_original>
